<compile_context>
chip_gen: v7x
topology: tpu7x:2x2x1
jax: 0.10.0
libtpu: 0.0.40
codegen_flags: <defaults>
</compile_context>

<pallas_src>
import functools
import math

import jax
import jax.numpy as jnp
from jax.experimental import pallas as pl
from jax.experimental.pallas import tpu as pltpu

_HIDDEN = 512
_LANE = 128
_SUBLANE = 8
_TM_TARGET = 256


def _round_up(n, m):
    return ((n + m - 1) // m) * m


# ------------------------------ fused kernel -------------------------------- #

def fused_vqvae_kernel(x_ref, noise_ref,
                       enc_w1_ref, enc_b1_ref, enc_w2_ref, enc_b2_ref,
                       cb_ref, cb_t_ref, cb_sq_ref,
                       dec_w1z_ref, dec_w1n_ref, dec_b1_ref,
                       dec_w2_ref, dec_b2_ref,
                       recon_ref, loss_ref,
                       *, tm, batch, num_emb):
    i = pl.program_id(0)

    # ---- encoder: Linear -> ReLU -> Linear (bf16 MXU operands, f32 accumulate/epilogue) ----
    x = x_ref[...].astype(jnp.bfloat16)
    h = jnp.dot(x, enc_w1_ref[...], preferred_element_type=jnp.float32) + enc_b1_ref[...]
    h = jnp.maximum(h, 0.0)
    z = (jnp.dot(h.astype(jnp.bfloat16), enc_w2_ref[...],
                 preferred_element_type=jnp.float32) + enc_b2_ref[...])

    # ---- VQ: nearest codebook entry (kept f32 so the argmin matches the reference) ----
    z_sq = jnp.sum(z * z, axis=1, keepdims=True)                          # (TM, 1)
    cross = jnp.dot(z, cb_t_ref[...], preferred_element_type=jnp.float32)  # (TM, K), plain NN matmul
    dist = z_sq + cb_sq_ref[...] - 2.0 * cross                            # (TM, K)

    # First-occurrence argmin (matches torch/jnp argmin tie-breaking).
    dmin = jnp.min(dist, axis=1, keepdims=True)
    iota = jax.lax.broadcasted_iota(jnp.int32, dist.shape, 1)
    idx = jnp.min(jnp.where(dist <= dmin, iota, num_emb), axis=1, keepdims=True)
    onehot = (iota == idx).astype(jnp.float32)                            # (TM, K)
    zq = jnp.dot(onehot, cb_ref[...], preferred_element_type=jnp.float32)  # (TM, E) exact rows

    # ---- VQ-loss partial for this batch tile (NaN-safe mask of ragged-block rows) ----
    row = jax.lax.broadcasted_iota(jnp.int32, (tm, 1), 0) + i * tm
    diff = jnp.where(row < batch, zq - z, 0.0)
    partial = jnp.sum(diff * diff, keepdims=True)                         # (1, 1)
    r = jax.lax.broadcasted_iota(jnp.int32, loss_ref.shape, 0)
    c = jax.lax.broadcasted_iota(jnp.int32, loss_ref.shape, 1)
    loss_ref[...] = jnp.where((r == 0) & (c == 0), partial, 0.0)          # full unmasked store

    # ---- decoder: concat(z_q, noise) folded into a split first matmul ----
    h2 = (jnp.dot(zq.astype(jnp.bfloat16), dec_w1z_ref[...],
                  preferred_element_type=jnp.float32)
          + jnp.dot(noise_ref[...].astype(jnp.bfloat16), dec_w1n_ref[...],
                    preferred_element_type=jnp.float32)
          + dec_b1_ref[...])
    h2 = jnp.maximum(h2, 0.0)
    recon = (jnp.dot(h2.astype(jnp.bfloat16), dec_w2_ref[...],
                     preferred_element_type=jnp.float32) + dec_b2_ref[...])
    recon_ref[...] = recon.astype(recon_ref.dtype)


# ------------------------------ JAX wrapper --------------------------------- #

@jax.jit
def conditional_vqvae_forward(params, x, noise):
    batch, input_dim = x.shape
    noise_dim = noise.shape[1]
    hidden = params["enc_w1_bf"].shape[1]
    num_emb, emb_dim = params["codebook"].shape
    output_dim = params["dec_w2"].shape[1]
    out_pad = params["dec_w2_bf"].shape[1]        # lane-dense (multiple of 128)

    # Tile so grid_n >= 2 when batch allows (v7x megacore), capped at 256; multiple of 8.
    tm = max(_SUBLANE, min(_TM_TARGET, _round_up(-(-batch // 2), _SUBLANE)))
    grid_n = -(-batch // tm)                      # ragged trailing block handled by Pallas

    kernel = functools.partial(fused_vqvae_kernel, tm=tm, batch=batch, num_emb=num_emb)

    def stream_spec(cols):                        # streamed activations: double-buffered (default)
        return pl.BlockSpec((tm, cols), lambda i: (i, 0))

    def weight_spec(rows, cols):                  # grid-invariant: single-buffered
        return pl.BlockSpec((rows, cols), lambda i: (0, 0), pipeline_mode=pl.Buffered(1))

    recon_p, loss_tiles = pl.pallas_call(
        kernel,
        grid=(grid_n,),
        in_specs=[
            stream_spec(input_dim),               # x
            stream_spec(noise_dim),               # noise
            weight_spec(input_dim, hidden),       # enc_w1 (bf16)
            weight_spec(1, hidden),               # enc_b1
            weight_spec(hidden, emb_dim),         # enc_w2 (bf16)
            weight_spec(1, emb_dim),              # enc_b2
            weight_spec(num_emb, emb_dim),        # codebook (f32)
            weight_spec(emb_dim, num_emb),        # codebook^T (f32)
            weight_spec(1, num_emb),              # |cb|^2
            weight_spec(emb_dim, hidden),         # dec_w1[:E] (bf16)
            weight_spec(noise_dim, hidden),       # dec_w1[E:] (bf16)
            weight_spec(1, hidden),               # dec_b1
            weight_spec(hidden, out_pad),         # dec_w2 (bf16, lane padded)
            weight_spec(1, out_pad),              # dec_b2 (lane padded)
        ],
        out_specs=(
            pl.BlockSpec((tm, out_pad), lambda i: (i, 0)),
            pl.BlockSpec((_SUBLANE, _LANE), lambda i: (i, 0)),
        ),
        out_shape=(
            jax.ShapeDtypeStruct((batch, out_pad), jnp.float32),
            jax.ShapeDtypeStruct((grid_n * _SUBLANE, _LANE), jnp.float32),
        ),
        compiler_params=pltpu.CompilerParams(dimension_semantics=("parallel",)),
    )(x, noise,
      params["enc_w1_bf"], params["enc_b1"], params["enc_w2_bf"], params["enc_b2"],
      params["codebook"], params["cb_t"], params["cb_sq"],
      params["dec_w1z_bf"], params["dec_w1n_bf"], params["dec_b1"],
      params["dec_w2_bf"], params["dec_b2_pad"])

    x_recon = recon_p[:, :output_dim]
    vq_loss = 1.25 * jnp.sum(loss_tiles) / (batch * emb_dim)
    return x_recon, vq_loss


# ----------------------- deterministic parameter init ----------------------- #

def init_params(key, input_dim, embedding_dim, num_embeddings, output_dim, noise_dim,
                hidden=_HIDDEN):
    ks = jax.random.split(key, 9)

    def linear(kw, kb, fan_in, fan_out):
        bound = 1.0 / math.sqrt(fan_in)
        w = jax.random.uniform(kw, (fan_in, fan_out), jnp.float32, -bound, bound)
        b = jax.random.uniform(kb, (1, fan_out), jnp.float32, -bound, bound)
        return w, b

    enc_w1, enc_b1 = linear(ks[0], ks[1], input_dim, hidden)
    enc_w2, enc_b2 = linear(ks[2], ks[3], hidden, embedding_dim)
    dec_w1, dec_b1 = linear(ks[4], ks[5], embedding_dim + noise_dim, hidden)
    dec_w2, dec_b2 = linear(ks[6], ks[7], hidden, output_dim)
    codebook = jax.random.uniform(
        ks[8], (num_embeddings, embedding_dim), jnp.float32,
        -1.0 / num_embeddings, 1.0 / num_embeddings)

    out_pad = _round_up(output_dim, _LANE)
    return dict(
        # f32 master copies (used by the pure-JAX reference / would be the training params)
        enc_w1=enc_w1, enc_b1=enc_b1, enc_w2=enc_w2, enc_b2=enc_b2,
        dec_w1=dec_w1, dec_b1=dec_b1, dec_w2=dec_w2, dec_b2=dec_b2,
        codebook=codebook,
        # kernel-ready tensors, derived ONCE here (no per-call wrapper preprocessing):
        enc_w1_bf=enc_w1.astype(jnp.bfloat16),
        enc_w2_bf=enc_w2.astype(jnp.bfloat16),
        dec_w1z_bf=dec_w1[:embedding_dim].astype(jnp.bfloat16),
        dec_w1n_bf=dec_w1[embedding_dim:].astype(jnp.bfloat16),
        dec_w2_bf=jnp.pad(dec_w2, ((0, 0), (0, out_pad - output_dim))).astype(jnp.bfloat16),
        dec_b2_pad=jnp.pad(dec_b2, ((0, 0), (0, out_pad - output_dim))),
        cb_t=codebook.T,                                      # (E, K) -> NN matmul in kernel
        cb_sq=jnp.sum(codebook * codebook, axis=1)[None, :],  # (1, K); recompute if codebook changes
    )


# ------------------------------ pure-JAX ref -------------------------------- #

def reference_forward(p, x, noise):
    """Original module math; matmul operands in bf16 to mirror the kernel's MXU dtype."""
    def mm(a, w):
        return jnp.dot(a.astype(jnp.bfloat16), w.astype(jnp.bfloat16),
                       preferred_element_type=jnp.float32)

    z = mm(jnp.maximum(mm(x, p["enc_w1"]) + p["enc_b1"], 0.0), p["enc_w2"]) + p["enc_b2"]
    cb = p["codebook"]
    dist = jnp.sum(z * z, 1, keepdims=True) + jnp.sum(cb * cb, 1) - 2.0 * (z @ cb.T)
    idx = jnp.argmin(dist, axis=1)
    z_q = cb[idx]
    loss = 1.25 * jnp.mean((z_q - z) ** 2)
    z_cat = jnp.concatenate([z_q, noise], axis=-1)
    x_recon = (mm(jnp.maximum(mm(z_cat, p["dec_w1"]) + p["dec_b1"], 0.0), p["dec_w2"])
               + p["dec_b2"])
    return x_recon, loss


# ---------------------------------- main ------------------------------------ #

if __name__ == "__main__":
    batch = 8
    input_dim = 32
    embedding_dim = 16
    num_embeddings = 64
    output_dim = 32
    noise_dim = 8

    key = jax.random.PRNGKey(0)
    k_params, k_x, k_noise = jax.random.split(key, 3)

    params = init_params(k_params, input_dim, embedding_dim, num_embeddings,
                         output_dim, noise_dim)
    x = jax.random.normal(k_x, (batch, input_dim), jnp.float32)
    noise = jax.random.normal(k_noise, (batch, noise_dim), jnp.float32)

    x_recon, vq_loss = conditional_vqvae_forward(params, x, noise)
    jax.block_until_ready((x_recon, vq_loss))

    ref_recon, ref_loss = reference_forward(params, x, noise)
    assert x_recon.shape == (batch, output_dim)
    assert jnp.allclose(x_recon, ref_recon, atol=1e-4, rtol=1e-4)
    assert jnp.allclose(vq_loss, ref_loss, atol=1e-5, rtol=1e-4)

    print("KERNEL_OK")
</pallas_src>

<mosaic_0001>
module attributes {stable_mosaic.version = 11 : i64} {
  func.func @fused_vqvae_kernel(%arg0: i32, %arg1: memref<8x32xf32, #tpu.memory_space<vmem>>, %arg2: memref<8x8xf32, #tpu.memory_space<vmem>>, %arg3: memref<32x512xbf16, #tpu.memory_space<vmem>>, %arg4: memref<1x512xf32, #tpu.memory_space<vmem>>, %arg5: memref<512x16xbf16, #tpu.memory_space<vmem>>, %arg6: memref<1x16xf32, #tpu.memory_space<vmem>>, %arg7: memref<64x16xf32, #tpu.memory_space<vmem>>, %arg8: memref<16x64xf32, #tpu.memory_space<vmem>>, %arg9: memref<1x64xf32, #tpu.memory_space<vmem>>, %arg10: memref<16x512xbf16, #tpu.memory_space<vmem>>, %arg11: memref<8x512xbf16, #tpu.memory_space<vmem>>, %arg12: memref<1x512xf32, #tpu.memory_space<vmem>>, %arg13: memref<512x128xbf16, #tpu.memory_space<vmem>>, %arg14: memref<1x128xf32, #tpu.memory_space<vmem>>, %arg15: memref<8x128xf32, #tpu.memory_space<vmem>>, %arg16: memref<8x128xf32, #tpu.memory_space<vmem>>) attributes {dimension_semantics = [#tpu.dimension_semantics<parallel>], iteration_bounds = array<i64: 1>, scalar_prefetch = 0 : i64, scratch_operands = 0 : i64, tpu.core_type = #tpu.core_type<tc>, window_params = [{transform_indices = @transform_0, window_bounds = array<i64: 8, 32>}, {transform_indices = @transform_1, window_bounds = array<i64: 8, 8>}, {pipeline_mode = #tpu.pipeline_mode<synchronous>, transform_indices = @transform_2, window_bounds = array<i64: 32, 512>}, {pipeline_mode = #tpu.pipeline_mode<synchronous>, transform_indices = @transform_3, window_bounds = array<i64: 1, 512>}, {pipeline_mode = #tpu.pipeline_mode<synchronous>, transform_indices = @transform_4, window_bounds = array<i64: 512, 16>}, {pipeline_mode = #tpu.pipeline_mode<synchronous>, transform_indices = @transform_5, window_bounds = array<i64: 1, 16>}, {pipeline_mode = #tpu.pipeline_mode<synchronous>, transform_indices = @transform_6, window_bounds = array<i64: 64, 16>}, {pipeline_mode = #tpu.pipeline_mode<synchronous>, transform_indices = @transform_7, window_bounds = array<i64: 16, 64>}, {pipeline_mode = #tpu.pipeline_mode<synchronous>, transform_indices = @transform_8, window_bounds = array<i64: 1, 64>}, {pipeline_mode = #tpu.pipeline_mode<synchronous>, transform_indices = @transform_9, window_bounds = array<i64: 16, 512>}, {pipeline_mode = #tpu.pipeline_mode<synchronous>, transform_indices = @transform_10, window_bounds = array<i64: 8, 512>}, {pipeline_mode = #tpu.pipeline_mode<synchronous>, transform_indices = @transform_11, window_bounds = array<i64: 1, 512>}, {pipeline_mode = #tpu.pipeline_mode<synchronous>, transform_indices = @transform_12, window_bounds = array<i64: 512, 128>}, {pipeline_mode = #tpu.pipeline_mode<synchronous>, transform_indices = @transform_13, window_bounds = array<i64: 1, 128>}, {transform_indices = @transform_14, window_bounds = array<i64: 8, 128>}, {transform_indices = @transform_15, window_bounds = array<i64: 8, 128>}]} {
    %c0 = arith.constant 0 : index
    %c0_0 = arith.constant 0 : index
    %0 = vector.load %arg1[%c0, %c0_0] : memref<8x32xf32, #tpu.memory_space<vmem>>, vector<8x32xf32>
    %1 = arith.truncf %0 : vector<8x32xf32> to vector<8x32xbf16>
    %c0_1 = arith.constant 0 : index
    %c0_2 = arith.constant 0 : index
    %2 = vector.load %arg3[%c0_1, %c0_2] : memref<32x512xbf16, #tpu.memory_space<vmem>>, vector<32x512xbf16>
    %cst = arith.constant dense<0.000000e+00> : vector<8x512xf32>
    %3 = tpu.matmul %1, %2, %cst {dimension_numbers = #tpu.dot_dimension_numbers<[1], [0], [0], [1], [0, 0, 1, 1], [], []>} : vector<8x32xbf16>, vector<32x512xbf16>, vector<8x512xf32> -> vector<8x512xf32>
    %c0_3 = arith.constant 0 : index
    %c0_4 = arith.constant 0 : index
    %4 = vector.load %arg4[%c0_3, %c0_4] : memref<1x512xf32, #tpu.memory_space<vmem>>, vector<1x512xf32>
    %5 = vector.broadcast %4 : vector<1x512xf32> to vector<8x512xf32>
    %6 = arith.addf %3, %5 : vector<8x512xf32>
    %cst_5 = arith.constant 0.000000e+00 : f32
    %7 = vector.broadcast %cst_5 : f32 to vector<8x512xf32>
    %8 = arith.maximumf %6, %7 : vector<8x512xf32>
    %9 = arith.truncf %8 : vector<8x512xf32> to vector<8x512xbf16>
    %c0_6 = arith.constant 0 : index
    %c0_7 = arith.constant 0 : index
    %10 = vector.load %arg5[%c0_6, %c0_7] : memref<512x16xbf16, #tpu.memory_space<vmem>>, vector<512x16xbf16>
    %cst_8 = arith.constant dense<0.000000e+00> : vector<8x16xf32>
    %11 = tpu.matmul %9, %10, %cst_8 {dimension_numbers = #tpu.dot_dimension_numbers<[1], [0], [0], [1], [0, 0, 1, 1], [], []>} : vector<8x512xbf16>, vector<512x16xbf16>, vector<8x16xf32> -> vector<8x16xf32>
    %c0_9 = arith.constant 0 : index
    %c0_10 = arith.constant 0 : index
    %12 = vector.load %arg6[%c0_9, %c0_10] : memref<1x16xf32, #tpu.memory_space<vmem>>, vector<1x16xf32>
    %13 = vector.broadcast %12 : vector<1x16xf32> to vector<8x16xf32>
    %14 = arith.addf %11, %13 : vector<8x16xf32>
    %15 = arith.mulf %14, %14 : vector<8x16xf32>
    %cst_11 = arith.constant dense<0.000000e+00> : vector<8xf32>
    %16 = vector.multi_reduction <add>, %15, %cst_11 [1] : vector<8x16xf32> to vector<8xf32>
    %17 = vector.shape_cast %16 : vector<8xf32> to vector<8x1xf32>
    %c0_12 = arith.constant 0 : index
    %c0_13 = arith.constant 0 : index
    %18 = vector.load %arg8[%c0_12, %c0_13] : memref<16x64xf32, #tpu.memory_space<vmem>>, vector<16x64xf32>
    %cst_14 = arith.constant dense<0.000000e+00> : vector<8x64xf32>
    %19 = tpu.matmul %14, %18, %cst_14 {dimension_numbers = #tpu.dot_dimension_numbers<[1], [0], [0], [1], [0, 0, 1, 1], [], []>} : vector<8x16xf32>, vector<16x64xf32>, vector<8x64xf32> -> vector<8x64xf32>
    %c0_15 = arith.constant 0 : index
    %c0_16 = arith.constant 0 : index
    %20 = vector.load %arg9[%c0_15, %c0_16] : memref<1x64xf32, #tpu.memory_space<vmem>>, vector<1x64xf32>
    %21 = vector.broadcast %17 : vector<8x1xf32> to vector<8x64xf32>
    %22 = vector.broadcast %20 : vector<1x64xf32> to vector<8x64xf32>
    %23 = arith.addf %21, %22 : vector<8x64xf32>
    %cst_17 = arith.constant 2.000000e+00 : f32
    %24 = vector.broadcast %cst_17 : f32 to vector<8x64xf32>
    %25 = arith.mulf %24, %19 : vector<8x64xf32>
    %26 = arith.subf %23, %25 : vector<8x64xf32>
    %cst_18 = arith.constant dense<0x7F800000> : vector<8xf32>
    %27 = vector.multi_reduction <minimumf>, %26, %cst_18 [1] : vector<8x64xf32> to vector<8xf32>
    %28 = vector.shape_cast %27 : vector<8xf32> to vector<8x1xf32>
    %29 = tpu.iota {dimensions = array<i32: 1>} : vector<8x64xi32>
    %30 = vector.broadcast %28 : vector<8x1xf32> to vector<8x64xf32>
    %31 = arith.cmpf ole, %26, %30 : vector<8x64xf32>
    %c64_i32 = arith.constant 64 : i32
    %32 = vector.broadcast %c64_i32 : i32 to vector<8x64xi32>
    %33 = arith.select %31, %29, %32 : vector<8x64xi1>, vector<8x64xi32>
    %cst_19 = arith.constant dense<2147483647> : vector<8xi32>
    %34 = vector.multi_reduction <minsi>, %33, %cst_19 [1] : vector<8x64xi32> to vector<8xi32>
    %35 = vector.shape_cast %34 : vector<8xi32> to vector<8x1xi32>
    %36 = vector.broadcast %35 : vector<8x1xi32> to vector<8x64xi32>
    %37 = arith.cmpi eq, %29, %36 : vector<8x64xi32>
    %38 = arith.extui %37 : vector<8x64xi1> to vector<8x64xi32>
    %39 = arith.sitofp %38 : vector<8x64xi32> to vector<8x64xf32>
    %c0_20 = arith.constant 0 : index
    %c0_21 = arith.constant 0 : index
    %40 = vector.load %arg7[%c0_20, %c0_21] : memref<64x16xf32, #tpu.memory_space<vmem>>, vector<64x16xf32>
    %cst_22 = arith.constant dense<0.000000e+00> : vector<8x16xf32>
    %41 = tpu.matmul %39, %40, %cst_22 {dimension_numbers = #tpu.dot_dimension_numbers<[1], [0], [0], [1], [0, 0, 1, 1], [], []>} : vector<8x64xf32>, vector<64x16xf32>, vector<8x16xf32> -> vector<8x16xf32>
    %42 = tpu.iota {dimensions = array<i32: 0>} : vector<8x1xi32>
    %c8_i32 = arith.constant 8 : i32
    %43 = arith.muli %arg0, %c8_i32 : i32
    %44 = vector.broadcast %43 : i32 to vector<8x1xi32>
    %45 = arith.addi %42, %44 : vector<8x1xi32>
    %c8_i32_23 = arith.constant 8 : i32
    %46 = vector.broadcast %c8_i32_23 : i32 to vector<8x1xi32>
    %47 = arith.cmpi slt, %45, %46 : vector<8x1xi32>
    %48 = arith.subf %41, %14 : vector<8x16xf32>
    %cst_24 = arith.constant 0.000000e+00 : f32
    %49 = vector.shape_cast %47 : vector<8x1xi1> to vector<8x1xi1>
    %50 = vector.broadcast %49 : vector<8x1xi1> to vector<8x16xi1>
    %51 = vector.broadcast %cst_24 : f32 to vector<8x16xf32>
    %52 = arith.select %50, %48, %51 : vector<8x16xi1>, vector<8x16xf32>
    %53 = arith.mulf %52, %52 : vector<8x16xf32>
    %54 = vector.shape_cast %53 : vector<8x16xf32> to vector<1x8x16xf32>
    %cst_25 = arith.constant dense<0.000000e+00> : vector<1xf32>
    %55 = vector.multi_reduction <add>, %54, %cst_25 [1, 2] : vector<1x8x16xf32> to vector<1xf32>
    %56 = vector.shape_cast %55 : vector<1xf32> to vector<1x1x1xf32>
    %57 = vector.extract %56[0, 0, 0] : f32 from vector<1x1x1xf32>
    %58 = vector.broadcast %57 : f32 to vector<1x1xf32>
    %59 = tpu.iota {dimensions = array<i32: 0>} : vector<8x128xi32>
    %60 = tpu.iota {dimensions = array<i32: 1>} : vector<8x128xi32>
    %c0_i32 = arith.constant 0 : i32
    %61 = vector.broadcast %c0_i32 : i32 to vector<8x128xi32>
    %62 = arith.cmpi eq, %59, %61 : vector<8x128xi32>
    %c0_i32_26 = arith.constant 0 : i32
    %63 = vector.broadcast %c0_i32_26 : i32 to vector<8x128xi32>
    %64 = arith.cmpi eq, %60, %63 : vector<8x128xi32>
    %65 = arith.andi %62, %64 : vector<8x128xi1>
    %cst_27 = arith.constant 0.000000e+00 : f32
    %66 = vector.shape_cast %58 : vector<1x1xf32> to vector<1x1xf32>
    %67 = vector.broadcast %66 : vector<1x1xf32> to vector<8x128xf32>
    %68 = vector.broadcast %cst_27 : f32 to vector<8x128xf32>
    %69 = arith.select %65, %67, %68 : vector<8x128xi1>, vector<8x128xf32>
    %c0_28 = arith.constant 0 : index
    %c0_29 = arith.constant 0 : index
    %70 = vector.load %arg16[%c0_28, %c0_29] : memref<8x128xf32, #tpu.memory_space<vmem>>, vector<8x128xf32>
    tpu.vector_store %arg16[%c0_28, %c0_29], %69 {strides = array<i32>} : memref<8x128xf32, #tpu.memory_space<vmem>>, vector<8x128xf32>,
    %71 = arith.truncf %41 : vector<8x16xf32> to vector<8x16xbf16>
    %c0_30 = arith.constant 0 : index
    %c0_31 = arith.constant 0 : index
    %72 = vector.load %arg10[%c0_30, %c0_31] : memref<16x512xbf16, #tpu.memory_space<vmem>>, vector<16x512xbf16>
    %cst_32 = arith.constant dense<0.000000e+00> : vector<8x512xf32>
    %73 = tpu.matmul %71, %72, %cst_32 {dimension_numbers = #tpu.dot_dimension_numbers<[1], [0], [0], [1], [0, 0, 1, 1], [], []>} : vector<8x16xbf16>, vector<16x512xbf16>, vector<8x512xf32> -> vector<8x512xf32>
    %c0_33 = arith.constant 0 : index
    %c0_34 = arith.constant 0 : index
    %74 = vector.load %arg2[%c0_33, %c0_34] : memref<8x8xf32, #tpu.memory_space<vmem>>, vector<8x8xf32>
    %75 = arith.truncf %74 : vector<8x8xf32> to vector<8x8xbf16>
    %c0_35 = arith.constant 0 : index
    %c0_36 = arith.constant 0 : index
    %76 = vector.load %arg11[%c0_35, %c0_36] : memref<8x512xbf16, #tpu.memory_space<vmem>>, vector<8x512xbf16>
    %cst_37 = arith.constant dense<0.000000e+00> : vector<8x512xf32>
    %77 = tpu.matmul %75, %76, %cst_37 {dimension_numbers = #tpu.dot_dimension_numbers<[1], [0], [0], [1], [0, 0, 1, 1], [], []>} : vector<8x8xbf16>, vector<8x512xbf16>, vector<8x512xf32> -> vector<8x512xf32>
    %78 = arith.addf %73, %77 : vector<8x512xf32>
    %c0_38 = arith.constant 0 : index
    %c0_39 = arith.constant 0 : index
    %79 = vector.load %arg12[%c0_38, %c0_39] : memref<1x512xf32, #tpu.memory_space<vmem>>, vector<1x512xf32>
    %80 = vector.broadcast %79 : vector<1x512xf32> to vector<8x512xf32>
    %81 = arith.addf %78, %80 : vector<8x512xf32>
    %cst_40 = arith.constant 0.000000e+00 : f32
    %82 = vector.broadcast %cst_40 : f32 to vector<8x512xf32>
    %83 = arith.maximumf %81, %82 : vector<8x512xf32>
    %84 = arith.truncf %83 : vector<8x512xf32> to vector<8x512xbf16>
    %c0_41 = arith.constant 0 : index
    %c0_42 = arith.constant 0 : index
    %85 = vector.load %arg13[%c0_41, %c0_42] : memref<512x128xbf16, #tpu.memory_space<vmem>>, vector<512x128xbf16>
    %cst_43 = arith.constant dense<0.000000e+00> : vector<8x128xf32>
    %86 = tpu.matmul %84, %85, %cst_43 {dimension_numbers = #tpu.dot_dimension_numbers<[1], [0], [0], [1], [0, 0, 1, 1], [], []>} : vector<8x512xbf16>, vector<512x128xbf16>, vector<8x128xf32> -> vector<8x128xf32>
    %c0_44 = arith.constant 0 : index
    %c0_45 = arith.constant 0 : index
    %87 = vector.load %arg14[%c0_44, %c0_45] : memref<1x128xf32, #tpu.memory_space<vmem>>, vector<1x128xf32>
    %88 = vector.broadcast %87 : vector<1x128xf32> to vector<8x128xf32>
    %89 = arith.addf %86, %88 : vector<8x128xf32>
    %c0_46 = arith.constant 0 : index
    %c0_47 = arith.constant 0 : index
    %90 = vector.load %arg15[%c0_46, %c0_47] : memref<8x128xf32, #tpu.memory_space<vmem>>, vector<8x128xf32>
    tpu.vector_store %arg15[%c0_46, %c0_47], %89 {strides = array<i32>} : memref<8x128xf32, #tpu.memory_space<vmem>>, vector<8x128xf32>,
    return
  }
  func.func @transform_0(%arg0: i32) -> (i32, i32) {
    %c0_i32 = arith.constant 0 : i32
    %c0_i32_0 = arith.constant 0 : i32
    return %arg0, %c0_i32 : i32, i32
  }
  func.func @transform_1(%arg0: i32) -> (i32, i32) {
    %c0_i32 = arith.constant 0 : i32
    %c0_i32_0 = arith.constant 0 : i32
    return %arg0, %c0_i32 : i32, i32
  }
  func.func @transform_2(%arg0: i32) -> (i32, i32) {
    %c0_i32 = arith.constant 0 : i32
    %c0_i32_0 = arith.constant 0 : i32
    %c0_i32_1 = arith.constant 0 : i32
    return %c0_i32, %c0_i32_0 : i32, i32
  }
  func.func @transform_3(%arg0: i32) -> (i32, i32) {
    %c0_i32 = arith.constant 0 : i32
    %c0_i32_0 = arith.constant 0 : i32
    %c0_i32_1 = arith.constant 0 : i32
    return %c0_i32, %c0_i32_0 : i32, i32
  }
  func.func @transform_4(%arg0: i32) -> (i32, i32) {
    %c0_i32 = arith.constant 0 : i32
    %c0_i32_0 = arith.constant 0 : i32
    %c0_i32_1 = arith.constant 0 : i32
    return %c0_i32, %c0_i32_0 : i32, i32
  }
  func.func @transform_5(%arg0: i32) -> (i32, i32) {
    %c0_i32 = arith.constant 0 : i32
    %c0_i32_0 = arith.constant 0 : i32
    %c0_i32_1 = arith.constant 0 : i32
    return %c0_i32, %c0_i32_0 : i32, i32
  }
  func.func @transform_6(%arg0: i32) -> (i32, i32) {
    %c0_i32 = arith.constant 0 : i32
    %c0_i32_0 = arith.constant 0 : i32
    %c0_i32_1 = arith.constant 0 : i32
    return %c0_i32, %c0_i32_0 : i32, i32
  }
  func.func @transform_7(%arg0: i32) -> (i32, i32) {
    %c0_i32 = arith.constant 0 : i32
    %c0_i32_0 = arith.constant 0 : i32
    %c0_i32_1 = arith.constant 0 : i32
    return %c0_i32, %c0_i32_0 : i32, i32
  }
  func.func @transform_8(%arg0: i32) -> (i32, i32) {
    %c0_i32 = arith.constant 0 : i32
    %c0_i32_0 = arith.constant 0 : i32
    %c0_i32_1 = arith.constant 0 : i32
    return %c0_i32, %c0_i32_0 : i32, i32
  }
  func.func @transform_9(%arg0: i32) -> (i32, i32) {
    %c0_i32 = arith.constant 0 : i32
    %c0_i32_0 = arith.constant 0 : i32
    %c0_i32_1 = arith.constant 0 : i32
    return %c0_i32, %c0_i32_0 : i32, i32
  }
  func.func @transform_10(%arg0: i32) -> (i32, i32) {
    %c0_i32 = arith.constant 0 : i32
    %c0_i32_0 = arith.constant 0 : i32
    %c0_i32_1 = arith.constant 0 : i32
    return %c0_i32, %c0_i32_0 : i32, i32
  }
  func.func @transform_11(%arg0: i32) -> (i32, i32) {
    %c0_i32 = arith.constant 0 : i32
    %c0_i32_0 = arith.constant 0 : i32
    %c0_i32_1 = arith.constant 0 : i32
    return %c0_i32, %c0_i32_0 : i32, i32
  }
  func.func @transform_12(%arg0: i32) -> (i32, i32) {
    %c0_i32 = arith.constant 0 : i32
    %c0_i32_0 = arith.constant 0 : i32
    %c0_i32_1 = arith.constant 0 : i32
    return %c0_i32, %c0_i32_0 : i32, i32
  }
  func.func @transform_13(%arg0: i32) -> (i32, i32) {
    %c0_i32 = arith.constant 0 : i32
    %c0_i32_0 = arith.constant 0 : i32
    %c0_i32_1 = arith.constant 0 : i32
    return %c0_i32, %c0_i32_0 : i32, i32
  }
  func.func @transform_14(%arg0: i32) -> (i32, i32) {
    %c0_i32 = arith.constant 0 : i32
    %c0_i32_0 = arith.constant 0 : i32
    return %arg0, %c0_i32 : i32, i32
  }
  func.func @transform_15(%arg0: i32) -> (i32, i32) {
    %c0_i32 = arith.constant 0 : i32
    %c0_i32_0 = arith.constant 0 : i32
    return %arg0, %c0_i32 : i32, i32
  }
}

</mosaic_0001>

<llo_original>
// kernel: conditional_vqvae_forward.1
$region0: #{conditional_vqvae_forward.1}
  #allocation0 [shape = 'u32[]', space=smem, size = 0x4, offset = 0x4, fixed_abs, tag = 'smem constant byte address 0x4 - core index']
  #allocation1 [shape = 'u32[144,128]{1,0:T(1,128)}', space=vmem, size = 0x12000, scoped, tag = 'internal scratch']
  %s0 = inlined_call_operand.vmem [shape: f32[8,32], index: 0, kind: input, shape index: {}]
  %s1 = inlined_call_operand.vmem [shape: f32[8,8], index: 1, kind: input, shape index: {}]
  %s2 = inlined_call_operand.vmem [shape: bf16[32,512], index: 2, kind: input, shape index: {}]
  %s3 = inlined_call_operand.vmem [shape: f32[1,512], index: 3, kind: input, shape index: {}]
  %s4 = inlined_call_operand.vmem [shape: bf16[512,16], index: 4, kind: input, shape index: {}]
  %s5 = inlined_call_operand.vmem [shape: f32[1,16], index: 5, kind: input, shape index: {}]
  %s6 = inlined_call_operand.vmem [shape: f32[64,16], index: 6, kind: input, shape index: {}]
  %s7 = inlined_call_operand.hbm [shape: f32[16,64], index: 7, kind: input, shape index: {}]
  %s8 = inlined_call_operand.hbm [shape: f32[1,64], index: 8, kind: input, shape index: {}]
  %s9 = inlined_call_operand.vmem [shape: bf16[16,512], index: 9, kind: input, shape index: {}]
  %s10 = inlined_call_operand.hbm [shape: bf16[8,512], index: 10, kind: input, shape index: {}]
  %s11 = inlined_call_operand.hbm [shape: f32[1,512], index: 11, kind: input, shape index: {}]
  %s12 = inlined_call_operand.vmem [shape: bf16[512,128], index: 12, kind: input, shape index: {}]
  %s13 = inlined_call_operand.hbm [shape: f32[1,128], index: 13, kind: input, shape index: {}]
  %s14 = inlined_call_operand.hbm [shape: f32[8,128], index: 14, kind: output, shape index: {0}]
  %s15 = inlined_call_operand.vmem [shape: f32[8,128], index: 15, kind: output, shape index: {1}]
  %16 = xla_tuple %s14, %s15
  %s17 = sld [smem:[#allocation0]]
  $region94: #{conditional_vqvae_forward.1} parent=0
    _
  %s19 = ssub.s32 1, %s17
  %s20 = scalar_select 0, %s19, %s17
  $region1: #{conditional_vqvae_forward.1} parent=0
    #allocation2 [shape = 'u8[8192]{0}', space=vmem, size = 0x2000, scoped, tag = 'input window, operand 7, single buffered']
    #allocation3 [shape = 's32[1]{0}', space=sflag, size = 0x4, scoped, tag = 'scoped memory for conditional_vqvae_forward.1']
    #allocation4 [shape = 's32[1]{0}', space=sflag, size = 0x4, scoped, tag = 'scoped memory for conditional_vqvae_forward.1']
    #allocation5 [shape = 'u8[512]{0}', space=vmem, size = 0x400, scoped, tag = 'input window, operand 8, single buffered']
    #allocation6 [shape = 's32[1]{0}', space=sflag, size = 0x4, scoped, tag = 'scoped memory for conditional_vqvae_forward.1']
    #allocation7 [shape = 'u8[8192]{0}', space=vmem, size = 0x2000, scoped, tag = 'input window, operand 10, single buffered']
    #allocation8 [shape = 'u8[2048]{0}', space=vmem, size = 0x800, scoped, tag = 'input window, operand 11, single buffered']
    #allocation9 [shape = 's32[1]{0}', space=sflag, size = 0x4, scoped, tag = 'scoped memory for conditional_vqvae_forward.1']
    #allocation10 [shape = 'u8[512]{0}', space=vmem, size = 0x400, scoped, tag = 'input window, operand 13, single buffered']
    #allocation11 [shape = 'u8[4096]{0}', space=vmem, size = 0x1000, scoped, tag = 'output window, operand 0, single buffered']
    %21 = vsyncpa [#allocation3], 0
    %22 = vsyncpa [#allocation6], 0
    %23 = vsyncpa [#allocation9], 0
    %24 = vsyncpa [#allocation4], 0
    // Predicated region
    $region2: #{conditional_vqvae_forward.1} parent=1 // pred_check
      _
    $region3: #{conditional_vqvae_forward.1} parent=1 // pred_check_branch
      %26 = sbr.rel (0) target = $region5
    $region4: #{conditional_vqvae_forward.1} parent=1 // pred_region
      _
    $region5: #{conditional_vqvae_forward.1} parent=1 // pred_fallthru
      _
    // Predicated region
    $region6: #{conditional_vqvae_forward.1} parent=1 // pred_check
      _
    $region7: #{conditional_vqvae_forward.1} parent=1 // pred_check_branch
      %28 = sbr.rel (0) target = $region9
    $region8: #{conditional_vqvae_forward.1} parent=1 // pred_region
      _
    $region9: #{conditional_vqvae_forward.1} parent=1 // pred_fallthru
      _
    // Predicated region
    $region10: #{conditional_vqvae_forward.1} parent=1 // pred_check
      _
    $region11: #{conditional_vqvae_forward.1} parent=1 // pred_check_branch
      %30 = sbr.rel (0) target = $region13
    $region12: #{conditional_vqvae_forward.1} parent=1 // pred_region
      _
    $region13: #{conditional_vqvae_forward.1} parent=1 // pred_fallthru
      _
    // Predicated region
    $region14: #{conditional_vqvae_forward.1} parent=1 // pred_check
      _
    $region15: #{conditional_vqvae_forward.1} parent=1 // pred_check_branch
      %32 = sbr.rel (0) target = $region17
    $region16: #{conditional_vqvae_forward.1} parent=1 // pred_region
      _
    $region17: #{conditional_vqvae_forward.1} parent=1 // pred_fallthru
      _
    // Predicated region
    $region18: #{conditional_vqvae_forward.1} parent=1 // pred_check
      _
    $region19: #{conditional_vqvae_forward.1} parent=1 // pred_check_branch
      %34 = sbr.rel (0) target = $region21
    $region20: #{conditional_vqvae_forward.1} parent=1 // pred_region
      _
    $region21: #{conditional_vqvae_forward.1} parent=1 // pred_fallthru
      _
    // Predicated region
    $region22: #{conditional_vqvae_forward.1} parent=1 // pred_check
      _
    $region23: #{conditional_vqvae_forward.1} parent=1 // pred_check_branch
      %36 = sbr.rel (0) target = $region25
    $region24: #{conditional_vqvae_forward.1} parent=1 // pred_region
      _
    $region25: #{conditional_vqvae_forward.1} parent=1 // pred_fallthru
      _
    // Predicated region
    $region26: #{conditional_vqvae_forward.1} parent=1 // pred_check
      _
    $region27: #{conditional_vqvae_forward.1} parent=1 // pred_check_branch
      %38 = sbr.rel (0) target = $region29
    $region28: #{conditional_vqvae_forward.1} parent=1 // pred_region
      _
    $region29: #{conditional_vqvae_forward.1} parent=1 // pred_fallthru
      _
    // Predicated region
    $region30: #{conditional_vqvae_forward.1} parent=1 // pred_check
      _
    $region31: #{conditional_vqvae_forward.1} parent=1 // pred_check_branch
      %40 = sbr.rel (0) target = $region33
    $region32: #{conditional_vqvae_forward.1} parent=1 // pred_region
      %s42 = ssub.s32 256, 256
      %43 = vsyncadd [#allocation3], %s42
      %s44 = sshll.u32 [#allocation2], 4
      %s45 = int_to_ptr.vmem [resolvable:$true] %s44
      %50 = dma.hbm_to_vmem [thread:$0]  %s7, 256, %s45, [#allocation3], 128, 128, 8
    $region33: #{conditional_vqvae_forward.1} parent=1 // pred_fallthru
      _
    // Predicated region
    $region34: #{conditional_vqvae_forward.1} parent=1 // pred_check
      _
    $region35: #{conditional_vqvae_forward.1} parent=1 // pred_check_branch
      %52 = sbr.rel (0) target = $region37
    $region36: #{conditional_vqvae_forward.1} parent=1 // pred_region
      %s54 = ssub.s32 16, 16
      %55 = vsyncadd [#allocation6], %s54
      %s57 = sshll.u32 [#allocation5], 4
      %s58 = int_to_ptr.vmem [resolvable:$true] %s57
      %60 = dma.hbm_to_vmem [thread:$0]  %s8, 16, %s58, [#allocation6]
    $region37: #{conditional_vqvae_forward.1} parent=1 // pred_fallthru
      _
    // Predicated region
    $region38: #{conditional_vqvae_forward.1} parent=1 // pred_check
      _
    $region39: #{conditional_vqvae_forward.1} parent=1 // pred_check_branch
      %62 = sbr.rel (0) target = $region41
    $region40: #{conditional_vqvae_forward.1} parent=1 // pred_region
      _
    $region41: #{conditional_vqvae_forward.1} parent=1 // pred_fallthru
      _
    // Predicated region
    $region42: #{conditional_vqvae_forward.1} parent=1 // pred_check
      _
    $region43: #{conditional_vqvae_forward.1} parent=1 // pred_check_branch
      %64 = sbr.rel (0) target = $region45
    $region44: #{conditional_vqvae_forward.1} parent=1 // pred_region
      %s66 = ssub.s32 256, 256
      %67 = vsyncadd [#allocation6], %s66
      %s69 = sshll.u32 [#allocation7], 4
      %s70 = int_to_ptr.vmem [resolvable:$true] %s69
      %72 = dma.hbm_to_vmem [thread:$0]  %s10, 256, %s70, [#allocation6]
    $region45: #{conditional_vqvae_forward.1} parent=1 // pred_fallthru
      _
    // Predicated region
    $region46: #{conditional_vqvae_forward.1} parent=1 // pred_check
      _
    $region47: #{conditional_vqvae_forward.1} parent=1 // pred_check_branch
      %74 = sbr.rel (0) target = $region49
    $region48: #{conditional_vqvae_forward.1} parent=1 // pred_region
      %s76 = ssub.s32 64, 64
      %77 = vsyncadd [#allocation9], %s76
      %s79 = sshll.u32 [#allocation8], 4
      %s80 = int_to_ptr.vmem [resolvable:$true] %s79
      %82 = dma.hbm_to_vmem [thread:$0]  %s11, 64, %s80, [#allocation9]
    $region49: #{conditional_vqvae_forward.1} parent=1 // pred_fallthru
      _
    // Predicated region
    $region50: #{conditional_vqvae_forward.1} parent=1 // pred_check
      _
    $region51: #{conditional_vqvae_forward.1} parent=1 // pred_check_branch
      %84 = sbr.rel (0) target = $region53
    $region52: #{conditional_vqvae_forward.1} parent=1 // pred_region
      _
    $region53: #{conditional_vqvae_forward.1} parent=1 // pred_fallthru
      _
    // Predicated region
    $region54: #{conditional_vqvae_forward.1} parent=1 // pred_check
      _
    $region55: #{conditional_vqvae_forward.1} parent=1 // pred_check_branch
      %86 = sbr.rel (0) target = $region57
    $region56: #{conditional_vqvae_forward.1} parent=1 // pred_region
      %s88 = ssub.s32 16, 16
      %89 = vsyncadd [#allocation9], %s88
      %s91 = sshll.u32 [#allocation10], 4
      %s92 = int_to_ptr.vmem [resolvable:$true] %s91
      %94 = dma.hbm_to_vmem [thread:$0]  %s13, 16, %s92, [#allocation9]
    $region57: #{conditional_vqvae_forward.1} parent=1 // pred_fallthru
      _
    // Predicated region
    $region58: #{conditional_vqvae_forward.1} parent=1 // pred_check
      _
    $region59: #{conditional_vqvae_forward.1} parent=1 // pred_check_branch
      %96 = sbr.rel (0) target = $region61
    $region60: #{conditional_vqvae_forward.1} parent=1 // pred_region
      %97 = dma.done [#allocation3], 256
    $region61: #{conditional_vqvae_forward.1} parent=1 // pred_fallthru
      _
    // Predicated region
    $region62: #{conditional_vqvae_forward.1} parent=1 // pred_check
      _
    $region63: #{conditional_vqvae_forward.1} parent=1 // pred_check_branch
      %99 = sbr.rel (0) target = $region65
    $region64: #{conditional_vqvae_forward.1} parent=1 // pred_region
      %100 = dma.done [#allocation6], 16
    $region65: #{conditional_vqvae_forward.1} parent=1 // pred_fallthru
      _
    // Predicated region
    $region66: #{conditional_vqvae_forward.1} parent=1 // pred_check
      _
    $region67: #{conditional_vqvae_forward.1} parent=1 // pred_check_branch
      %102 = sbr.rel (0) target = $region69
    $region68: #{conditional_vqvae_forward.1} parent=1 // pred_region
      %103 = dma.done [#allocation6], 256
    $region69: #{conditional_vqvae_forward.1} parent=1 // pred_fallthru
      _
    // Predicated region
    $region70: #{conditional_vqvae_forward.1} parent=1 // pred_check
      _
    $region71: #{conditional_vqvae_forward.1} parent=1 // pred_check_branch
      %105 = sbr.rel (0) target = $region73
    $region72: #{conditional_vqvae_forward.1} parent=1 // pred_region
      %106 = dma.done [#allocation9], 64
    $region73: #{conditional_vqvae_forward.1} parent=1 // pred_fallthru
      _
    // Predicated region
    $region74: #{conditional_vqvae_forward.1} parent=1 // pred_check
      _
    $region75: #{conditional_vqvae_forward.1} parent=1 // pred_check_branch
      %108 = sbr.rel (0) target = $region77
    $region76: #{conditional_vqvae_forward.1} parent=1 // pred_region
      %109 = dma.done [#allocation9], 16
    $region77: #{conditional_vqvae_forward.1} parent=1 // pred_fallthru
      _
    %v111 = vld [vmem:[%s0] sm:$0xff]
    %v112 = vpack.c.bf16 %v111, %v111
    %v113 = vld [vmem:[%s2] sm:$0xff]
    %v114 = vld [vmem:[%s2 + $0x8] sm:$0xff]
    %v115 = vld [vmem:[%s2 + $0x10] sm:$0xff]
    %v116 = vld [vmem:[%s2 + $0x18] sm:$0xff]
    %v117 = vld [vmem:[%s2 + $0x20] sm:$0xff]
    %v118 = vld [vmem:[%s2 + $0x28] sm:$0xff]
    %v119 = vld [vmem:[%s2 + $0x30] sm:$0xff]
    %v120 = vld [vmem:[%s2 + $0x38] sm:$0xff]
    %v121 = vld [vmem:[%s3] sm:$0xf]
    %v123 = vlaneseq
    %v124 = vshrl.u32 %v123, 7
    %v125 = vsub.s32 0, %v124
    %v126 = vrot.slane %v121, %v125
    %v127 = vlaneseq
    %v128 = vshrl.u32 %v127, 7
    %v129 = vsub.s32 1, %v128
    %v130 = vrot.slane %v121, %v129
    %v131 = vlaneseq
    %v132 = vshrl.u32 %v131, 7
    %v133 = vsub.s32 2, %v132
    %v134 = vrot.slane %v121, %v133
    %v135 = vlaneseq
    %v136 = vshrl.u32 %v135, 7
    %v137 = vsub.s32 3, %v136
    %v138 = vrot.slane %v121, %v137
    %v151 = vunpack.c.l.b16 %v113
    %v152 = vunpack.c.h.b16 %v113
    %v153 = vunpack.c.l.b16 %v114
    %v154 = vunpack.c.h.b16 %v114
    %v155 = vunpack.c.l.b16 %v115
    %v156 = vunpack.c.h.b16 %v115
    %v157 = vunpack.c.l.b16 %v116
    %v158 = vunpack.c.h.b16 %v116
    %v159 = vunpack.c.l.b16 %v117
    %v160 = vunpack.c.h.b16 %v117
    %v161 = vunpack.c.l.b16 %v118
    %v162 = vunpack.c.h.b16 %v118
    %v163 = vunpack.c.l.b16 %v119
    %v164 = vunpack.c.h.b16 %v119
    %v165 = vunpack.c.l.b16 %v120
    %v166 = vunpack.c.h.b16 %v120
    %v167 = vpack.c.b16 %v155, %v151
    %v168 = vpack.c.b16 %v156, %v152
    %v169 = vpack.c.b16 %v157, %v153
    %v170 = vpack.c.b16 %v158, %v154
    %v171 = vpack.c.b16 %v163, %v159
    %v172 = vpack.c.b16 %v164, %v160
    %v173 = vpack.c.b16 %v165, %v161
    %v174 = vpack.c.b16 %v166, %v162
    %vm183 = vcmask 261120
    %v185 = vsel %vm183, %v112, 0
    %187 = vmatprep.subr.bf16.mxu0 %v168
    %188 = vmatpush1.bf16.msra.mxu0 %v167
    %189 = vmatprep.subr.bf16.mxu0 %v172
    %190 = vmatpush1.bf16.msra.mxu0 %v171
    %191 = vmatprep.subr.bf16.mxu0 0
    %192 = vmatpush1.bf16.msra.mxu0 0
    %193 = vmatprep.subr.bf16.mxu0 0
    %194 = vmatpush1.bf16.msra.mxu0 0
    %195 = vmatprep.subr.bf16.mxu0 0
    %196 = vmatpush1.bf16.msra.mxu0 0
    %197 = vmatprep.subr.bf16.mxu0 0
    %198 = vmatpush1.bf16.msra.mxu0 0
    %199 = vmatprep.subr.bf16.mxu0 0
    %200 = vmatpush1.bf16.msra.mxu0 0
    %201 = vmatprep.subr.bf16.mxu0 0
    %202 = vmatpush1.bf16.msra.mxu0 0
    %203 = vmatprep.subr.bf16.mxu0 0
    %204 = vmatpush1.bf16.msra.mxu0 0
    %205 = vmatprep.subr.bf16.mxu0 0
    %206 = vmatpush1.bf16.msra.mxu0 0
    %207 = vmatprep.subr.bf16.mxu0 0
    %208 = vmatpush1.bf16.msra.mxu0 0
    %209 = vmatprep.subr.bf16.mxu0 0
    %210 = vmatpush1.bf16.msra.mxu0 0
    %211 = vmatprep.subr.bf16.mxu0 0
    %212 = vmatpush1.bf16.msra.mxu0 0
    %213 = vmatprep.subr.bf16.mxu0 0
    %214 = vmatpush1.bf16.msra.mxu0 0
    %215 = vmatprep.subr.bf16.mxu0 0
    %216 = vmatpush1.bf16.msra.mxu0 0
    %217 = vmatprep.subr.bf16.mxu0 0
    %218 = vmatpush1.bf16.msra.mxu0 0
    %219 = vmatprep.mubr.bf16.mxu0 0
    %220 = vmatmul.mubr.bf16.gmra.mrb[0].mxu0 %v185
    %v221 = vpop.f32.mrb[0].mxu0
    %v222 = vadd.f32 %v126, %v221
    %v223 = vpop.f32.mrb[0].mxu0
    %v224 = vadd.f32 %v130, %v223
    %v225 = vpop.f32.mrb[0].mxu0
    %v226 = vpop.f32.mrb[0].mxu0
    %227 = vdwg.mxu0
    %228 = vmatprep.subr.bf16.mxu0 %v170
    %229 = vmatpush1.bf16.msra.mxu0 %v169
    %230 = vmatprep.subr.bf16.mxu0 %v174
    %231 = vmatpush1.bf16.msra.mxu0 %v173
    %232 = vmatprep.subr.bf16.mxu0 0
    %233 = vmatpush1.bf16.msra.mxu0 0
    %234 = vmatprep.subr.bf16.mxu0 0
    %235 = vmatpush1.bf16.msra.mxu0 0
    %236 = vmatprep.subr.bf16.mxu0 0
    %237 = vmatpush1.bf16.msra.mxu0 0
    %238 = vmatprep.subr.bf16.mxu0 0
    %239 = vmatpush1.bf16.msra.mxu0 0
    %240 = vmatprep.subr.bf16.mxu0 0
    %241 = vmatpush1.bf16.msra.mxu0 0
    %242 = vmatprep.subr.bf16.mxu0 0
    %243 = vmatpush1.bf16.msra.mxu0 0
    %244 = vmatprep.subr.bf16.mxu0 0
    %245 = vmatpush1.bf16.msra.mxu0 0
    %246 = vmatprep.subr.bf16.mxu0 0
    %247 = vmatpush1.bf16.msra.mxu0 0
    %248 = vmatprep.subr.bf16.mxu0 0
    %249 = vmatpush1.bf16.msra.mxu0 0
    %250 = vmatprep.subr.bf16.mxu0 0
    %251 = vmatpush1.bf16.msra.mxu0 0
    %252 = vmatprep.subr.bf16.mxu0 0
    %253 = vmatpush1.bf16.msra.mxu0 0
    %254 = vmatprep.subr.bf16.mxu0 0
    %255 = vmatpush1.bf16.msra.mxu0 0
    %256 = vmatprep.subr.bf16.mxu0 0
    %257 = vmatpush1.bf16.msra.mxu0 0
    %258 = vmatprep.subr.bf16.mxu0 0
    %259 = vmatpush1.bf16.msra.mxu0 0
    %260 = vmatprep.mubr.bf16.mxu0 0
    %261 = vmatmul.mubr.bf16.gmra.mrb[0].mxu0 %v185
    %v262 = vpop.f32.mrb[0].mxu0
    %v263 = vadd.f32 %v134, %v262
    %v264 = vpop.f32.mrb[0].mxu0
    %v265 = vadd.f32 %v138, %v264
    %v266 = vpop.f32.mrb[0].mxu0
    %v267 = vpop.f32.mrb[0].mxu0
    %268 = vdwg.mxu0
    %v269 = vmax.f32 %v222, 0.0
    %v270 = vmax.f32 %v224, 0.0
    %v271 = vmax.f32 %v263, 0.0
    %v272 = vmax.f32 %v265, 0.0
    %v273 = vpack.c.bf16 %v269, %v269
    %v274 = vpack.c.bf16 %v270, %v270
    %v275 = vpack.c.bf16 %v271, %v271
    %v276 = vpack.c.bf16 %v272, %v272
    %v277 = vld [vmem:[%s4] sm:$0xf]
    %v278 = vld [vmem:[%s4 + $0x4] sm:$0xf]
    %v279 = vld [vmem:[%s4 + $0x8] sm:$0xf]
    %v280 = vld [vmem:[%s4 + $0xc] sm:$0xf]
    %v281 = vld [vmem:[%s4 + $0x10] sm:$0xf]
    %v282 = vld [vmem:[%s4 + $0x14] sm:$0xf]
    %v283 = vld [vmem:[%s4 + $0x18] sm:$0xf]
    %v284 = vld [vmem:[%s4 + $0x1c] sm:$0xf]
    %v285 = vld [vmem:[%s4 + $0x20] sm:$0xf]
    %v286 = vld [vmem:[%s4 + $0x24] sm:$0xf]
    %v287 = vld [vmem:[%s4 + $0x28] sm:$0xf]
    %v288 = vld [vmem:[%s4 + $0x2c] sm:$0xf]
    %v289 = vld [vmem:[%s4 + $0x30] sm:$0xf]
    %v290 = vld [vmem:[%s4 + $0x34] sm:$0xf]
    %v291 = vld [vmem:[%s4 + $0x38] sm:$0xf]
    %v292 = vld [vmem:[%s4 + $0x3c] sm:$0xf]
    %v293 = vld [vmem:[%s4 + $0x40] sm:$0xf]
    %v294 = vld [vmem:[%s4 + $0x44] sm:$0xf]
    %v295 = vld [vmem:[%s4 + $0x48] sm:$0xf]
    %v296 = vld [vmem:[%s4 + $0x4c] sm:$0xf]
    %v297 = vld [vmem:[%s4 + $0x50] sm:$0xf]
    %v298 = vld [vmem:[%s4 + $0x54] sm:$0xf]
    %v299 = vld [vmem:[%s4 + $0x58] sm:$0xf]
    %v300 = vld [vmem:[%s4 + $0x5c] sm:$0xf]
    %v301 = vld [vmem:[%s4 + $0x60] sm:$0xf]
    %v302 = vld [vmem:[%s4 + $0x64] sm:$0xf]
    %v303 = vld [vmem:[%s4 + $0x68] sm:$0xf]
    %v304 = vld [vmem:[%s4 + $0x6c] sm:$0xf]
    %v305 = vld [vmem:[%s4 + $0x70] sm:$0xf]
    %v306 = vld [vmem:[%s4 + $0x74] sm:$0xf]
    %v307 = vld [vmem:[%s4 + $0x78] sm:$0xf]
    %v308 = vld [vmem:[%s4 + $0x7c] sm:$0xf]
    %v309 = vld [vmem:[%s4 + $0x80] sm:$0xf]
    %v310 = vld [vmem:[%s4 + $0x84] sm:$0xf]
    %v311 = vld [vmem:[%s4 + $0x88] sm:$0xf]
    %v312 = vld [vmem:[%s4 + $0x8c] sm:$0xf]
    %v313 = vld [vmem:[%s4 + $0x90] sm:$0xf]
    %v314 = vld [vmem:[%s4 + $0x94] sm:$0xf]
    %v315 = vld [vmem:[%s4 + $0x98] sm:$0xf]
    %v316 = vld [vmem:[%s4 + $0x9c] sm:$0xf]
    %v317 = vld [vmem:[%s4 + $0xa0] sm:$0xf]
    %v318 = vld [vmem:[%s4 + $0xa4] sm:$0xf]
    %v319 = vld [vmem:[%s4 + $0xa8] sm:$0xf]
    %v320 = vld [vmem:[%s4 + $0xac] sm:$0xf]
    %v321 = vld [vmem:[%s4 + $0xb0] sm:$0xf]
    %v322 = vld [vmem:[%s4 + $0xb4] sm:$0xf]
    %v323 = vld [vmem:[%s4 + $0xb8] sm:$0xf]
    %v324 = vld [vmem:[%s4 + $0xbc] sm:$0xf]
    %v325 = vld [vmem:[%s4 + $0xc0] sm:$0xf]
    %v326 = vld [vmem:[%s4 + $0xc4] sm:$0xf]
    %v327 = vld [vmem:[%s4 + $0xc8] sm:$0xf]
    %v328 = vld [vmem:[%s4 + $0xcc] sm:$0xf]
    %v329 = vld [vmem:[%s4 + $0xd0] sm:$0xf]
    %v330 = vld [vmem:[%s4 + $0xd4] sm:$0xf]
    %v331 = vld [vmem:[%s4 + $0xd8] sm:$0xf]
    %v332 = vld [vmem:[%s4 + $0xdc] sm:$0xf]
    %v333 = vld [vmem:[%s4 + $0xe0] sm:$0xf]
    %v334 = vld [vmem:[%s4 + $0xe4] sm:$0xf]
    %v335 = vld [vmem:[%s4 + $0xe8] sm:$0xf]
    %v336 = vld [vmem:[%s4 + $0xec] sm:$0xf]
    %v337 = vld [vmem:[%s4 + $0xf0] sm:$0xf]
    %v338 = vld [vmem:[%s4 + $0xf4] sm:$0xf]
    %v339 = vld [vmem:[%s4 + $0xf8] sm:$0xf]
    %v340 = vld [vmem:[%s4 + $0xfc] sm:$0xf]
    %v341 = vld [vmem:[%s5] sm:$0x1]
    %v343 = vlaneseq
    %v344 = vshrl.u32 %v343, 7
    %v345 = vsub.s32 0, %v344
    %v346 = vrot.slane %v341, %v345
    %v412 = vunpack.c.l.b16 %v277
    %v413 = vunpack.c.l.b16 %v278
    %v414 = vunpack.c.l.b16 %v279
    %v415 = vunpack.c.l.b16 %v280
    %v416 = vunpack.c.l.b16 %v281
    %v417 = vunpack.c.l.b16 %v282
    %v418 = vunpack.c.l.b16 %v283
    %v419 = vunpack.c.l.b16 %v284
    %v420 = vunpack.c.l.b16 %v285
    %v421 = vunpack.c.l.b16 %v286
    %v422 = vunpack.c.l.b16 %v287
    %v423 = vunpack.c.l.b16 %v288
    %v424 = vunpack.c.l.b16 %v289
    %v425 = vunpack.c.l.b16 %v290
    %v426 = vunpack.c.l.b16 %v291
    %v427 = vunpack.c.l.b16 %v292
    %v428 = vunpack.c.l.b16 %v293
    %v429 = vunpack.c.l.b16 %v294
    %v430 = vunpack.c.l.b16 %v295
    %v431 = vunpack.c.l.b16 %v296
    %v432 = vunpack.c.l.b16 %v297
    %v433 = vunpack.c.l.b16 %v298
    %v434 = vunpack.c.l.b16 %v299
    %v435 = vunpack.c.l.b16 %v300
    %v436 = vunpack.c.l.b16 %v301
    %v437 = vunpack.c.l.b16 %v302
    %v438 = vunpack.c.l.b16 %v303
    %v439 = vunpack.c.l.b16 %v304
    %v440 = vunpack.c.l.b16 %v305
    %v441 = vunpack.c.l.b16 %v306
    %v442 = vunpack.c.l.b16 %v307
    %v443 = vunpack.c.l.b16 %v308
    %v444 = vunpack.c.l.b16 %v309
    %v445 = vunpack.c.l.b16 %v310
    %v446 = vunpack.c.l.b16 %v311
    %v447 = vunpack.c.l.b16 %v312
    %v448 = vunpack.c.l.b16 %v313
    %v449 = vunpack.c.l.b16 %v314
    %v450 = vunpack.c.l.b16 %v315
    %v451 = vunpack.c.l.b16 %v316
    %v452 = vunpack.c.l.b16 %v317
    %v453 = vunpack.c.l.b16 %v318
    %v454 = vunpack.c.l.b16 %v319
    %v455 = vunpack.c.l.b16 %v320
    %v456 = vunpack.c.l.b16 %v321
    %v457 = vunpack.c.l.b16 %v322
    %v458 = vunpack.c.l.b16 %v323
    %v459 = vunpack.c.l.b16 %v324
    %v460 = vunpack.c.l.b16 %v325
    %v461 = vunpack.c.l.b16 %v326
    %v462 = vunpack.c.l.b16 %v327
    %v463 = vunpack.c.l.b16 %v328
    %v464 = vunpack.c.l.b16 %v329
    %v465 = vunpack.c.l.b16 %v330
    %v466 = vunpack.c.l.b16 %v331
    %v467 = vunpack.c.l.b16 %v332
    %v468 = vunpack.c.l.b16 %v333
    %v469 = vunpack.c.l.b16 %v334
    %v470 = vunpack.c.l.b16 %v335
    %v471 = vunpack.c.l.b16 %v336
    %v472 = vunpack.c.l.b16 %v337
    %v473 = vunpack.c.l.b16 %v338
    %v474 = vunpack.c.l.b16 %v339
    %v475 = vunpack.c.l.b16 %v340
    %v476 = vpack.c.b16 %v413, %v412
    %v477 = vpack.c.b16 %v415, %v414
    %v478 = vpack.c.b16 %v417, %v416
    %v479 = vpack.c.b16 %v419, %v418
    %v480 = vpack.c.b16 %v421, %v420
    %v481 = vpack.c.b16 %v423, %v422
    %v482 = vpack.c.b16 %v425, %v424
    %v483 = vpack.c.b16 %v427, %v426
    %v484 = vpack.c.b16 %v429, %v428
    %v485 = vpack.c.b16 %v431, %v430
    %v486 = vpack.c.b16 %v433, %v432
    %v487 = vpack.c.b16 %v435, %v434
    %v488 = vpack.c.b16 %v437, %v436
    %v489 = vpack.c.b16 %v439, %v438
    %v490 = vpack.c.b16 %v441, %v440
    %v491 = vpack.c.b16 %v443, %v442
    %v492 = vpack.c.b16 %v445, %v444
    %v493 = vpack.c.b16 %v447, %v446
    %v494 = vpack.c.b16 %v449, %v448
    %v495 = vpack.c.b16 %v451, %v450
    %v496 = vpack.c.b16 %v453, %v452
    %v497 = vpack.c.b16 %v455, %v454
    %v498 = vpack.c.b16 %v457, %v456
    %v499 = vpack.c.b16 %v459, %v458
    %v500 = vpack.c.b16 %v461, %v460
    %v501 = vpack.c.b16 %v463, %v462
    %v502 = vpack.c.b16 %v465, %v464
    %v503 = vpack.c.b16 %v467, %v466
    %v504 = vpack.c.b16 %v469, %v468
    %v505 = vpack.c.b16 %v471, %v470
    %v506 = vpack.c.b16 %v473, %v472
    %v507 = vpack.c.b16 %v475, %v474
    %540 = vmatprep.subr.bf16.mxu0 0
    %541 = vmatpush1.bf16.msra.mxu0 %v476
    %542 = vmatprep.subr.bf16.mxu0 0
    %543 = vmatpush1.bf16.msra.mxu0 %v477
    %544 = vmatprep.subr.bf16.mxu0 0
    %545 = vmatpush1.bf16.msra.mxu0 %v478
    %546 = vmatprep.subr.bf16.mxu0 0
    %547 = vmatpush1.bf16.msra.mxu0 %v479
    %548 = vmatprep.subr.bf16.mxu0 0
    %549 = vmatpush1.bf16.msra.mxu0 %v480
    %550 = vmatprep.subr.bf16.mxu0 0
    %551 = vmatpush1.bf16.msra.mxu0 %v481
    %552 = vmatprep.subr.bf16.mxu0 0
    %553 = vmatpush1.bf16.msra.mxu0 %v482
    %554 = vmatprep.subr.bf16.mxu0 0
    %555 = vmatpush1.bf16.msra.mxu0 %v483
    %556 = vmatprep.subr.bf16.mxu0 0
    %557 = vmatpush1.bf16.msra.mxu0 %v484
    %558 = vmatprep.subr.bf16.mxu0 0
    %559 = vmatpush1.bf16.msra.mxu0 %v485
    %560 = vmatprep.subr.bf16.mxu0 0
    %561 = vmatpush1.bf16.msra.mxu0 %v486
    %562 = vmatprep.subr.bf16.mxu0 0
    %563 = vmatpush1.bf16.msra.mxu0 %v487
    %564 = vmatprep.subr.bf16.mxu0 0
    %565 = vmatpush1.bf16.msra.mxu0 %v488
    %566 = vmatprep.subr.bf16.mxu0 0
    %567 = vmatpush1.bf16.msra.mxu0 %v489
    %568 = vmatprep.subr.bf16.mxu0 0
    %569 = vmatpush1.bf16.msra.mxu0 %v490
    %570 = vmatprep.subr.bf16.mxu0 0
    %571 = vmatpush1.bf16.msra.mxu0 %v491
    %572 = vmatprep.mubr.bf16.mxu0 %v274
    %573 = vmatmul.mubr.bf16.gmra.mrb[0].mxu0 %v273
    %v574 = vpop.f32.mrb[0].mxu0
    %v575 = vadd.f32 %v346, %v574
    %v576 = vpop.f32.mrb[0].mxu0
    %v577 = vpop.f32.mrb[0].mxu0
    %v578 = vpop.f32.mrb[0].mxu0
    %579 = vdwg.mxu0
    %580 = vmatprep.subr.bf16.mxu0 0
    %581 = vmatpush1.bf16.msra.mxu0 %v492
    %582 = vmatprep.subr.bf16.mxu0 0
    %583 = vmatpush1.bf16.msra.mxu0 %v493
    %584 = vmatprep.subr.bf16.mxu0 0
    %585 = vmatpush1.bf16.msra.mxu0 %v494
    %586 = vmatprep.subr.bf16.mxu0 0
    %587 = vmatpush1.bf16.msra.mxu0 %v495
    %588 = vmatprep.subr.bf16.mxu0 0
    %589 = vmatpush1.bf16.msra.mxu0 %v496
    %590 = vmatprep.subr.bf16.mxu0 0
    %591 = vmatpush1.bf16.msra.mxu0 %v497
    %592 = vmatprep.subr.bf16.mxu0 0
    %593 = vmatpush1.bf16.msra.mxu0 %v498
    %594 = vmatprep.subr.bf16.mxu0 0
    %595 = vmatpush1.bf16.msra.mxu0 %v499
    %596 = vmatprep.subr.bf16.mxu0 0
    %597 = vmatpush1.bf16.msra.mxu0 %v500
    %598 = vmatprep.subr.bf16.mxu0 0
    %599 = vmatpush1.bf16.msra.mxu0 %v501
    %600 = vmatprep.subr.bf16.mxu0 0
    %601 = vmatpush1.bf16.msra.mxu0 %v502
    %602 = vmatprep.subr.bf16.mxu0 0
    %603 = vmatpush1.bf16.msra.mxu0 %v503
    %604 = vmatprep.subr.bf16.mxu0 0
    %605 = vmatpush1.bf16.msra.mxu0 %v504
    %606 = vmatprep.subr.bf16.mxu0 0
    %607 = vmatpush1.bf16.msra.mxu0 %v505
    %608 = vmatprep.subr.bf16.mxu0 0
    %609 = vmatpush1.bf16.msra.mxu0 %v506
    %610 = vmatprep.subr.bf16.mxu0 0
    %611 = vmatpush1.bf16.msra.mxu0 %v507
    %612 = vmatprep.mubr.bf16.mxu0 %v276
    %613 = vmatmul.mubr.bf16.gmra.mrb[0].mxu0 %v275
    %v614 = vpop.f32.mrb[0].mxu0
    %v615 = vadd.f32 %v575, %v614
    %v616 = vpop.f32.mrb[0].mxu0
    %v617 = vpop.f32.mrb[0].mxu0
    %v618 = vpop.f32.mrb[0].mxu0
    %619 = vdwg.mxu0
    %v620 = vmul.f32 %v615, %v615
    %vm621 = vcmask 130048
    %v622 = vsel %vm621, %v620, 0.0
    %623 = vadd.xlane.f32.xlu0 %v622
    %v624 = vpop.xlane.xlu0 %623
    %v625 = vld [vmem:[#allocation2] sm:$0xff]
    %v626 = vld [vmem:[#allocation2 + $0x8] sm:$0xff]
    %v628 = vsel %vm621, %v615, 0
    %630 = vmatprep.subr.mxu0 0.0
    %631 = vmatpush1.msra.mxu0 %v625
    %632 = vmatprep.subr.mxu0 0.0
    %633 = vmatpush1.msra.mxu0 %v626
    %634 = vmatprep.subr.mxu0 0.0
    %635 = vmatpush1.msra.mxu0 0.0
    %636 = vmatprep.subr.mxu0 0.0
    %637 = vmatpush1.msra.mxu0 0.0
    %638 = vmatprep.subr.mxu0 0.0
    %639 = vmatpush1.msra.mxu0 0.0
    %640 = vmatprep.subr.mxu0 0.0
    %641 = vmatpush1.msra.mxu0 0.0
    %642 = vmatprep.subr.mxu0 0.0
    %643 = vmatpush1.msra.mxu0 0.0
    %644 = vmatprep.subr.mxu0 0.0
    %645 = vmatpush1.msra.mxu0 0.0
    %646 = vmatprep.subr.mxu0 0.0
    %647 = vmatpush1.msra.mxu0 0.0
    %648 = vmatprep.subr.mxu0 0.0
    %649 = vmatpush1.msra.mxu0 0.0
    %650 = vmatprep.subr.mxu0 0.0
    %651 = vmatpush1.msra.mxu0 0.0
    %652 = vmatprep.subr.mxu0 0.0
    %653 = vmatpush1.msra.mxu0 0.0
    %654 = vmatprep.subr.mxu0 0.0
    %655 = vmatpush1.msra.mxu0 0.0
    %656 = vmatprep.subr.mxu0 0.0
    %657 = vmatpush1.msra.mxu0 0.0
    %658 = vmatprep.subr.mxu0 0.0
    %659 = vmatpush1.msra.mxu0 0.0
    %660 = vmatprep.subr.mxu0 0.0
    %661 = vmatpush1.msra.mxu0 0.0
    %662 = vmatprep.subr.mxu0 0.0
    %663 = vmatpush1.msra.mxu0 0.0
    %664 = vmatprep.subr.mxu0 0.0
    %665 = vmatpush1.msra.mxu0 0.0
    %666 = vmatprep.subr.mxu0 0.0
    %667 = vmatpush1.msra.mxu0 0.0
    %668 = vmatprep.subr.mxu0 0.0
    %669 = vmatpush1.msra.mxu0 0.0
    %670 = vmatprep.subr.mxu0 0.0
    %671 = vmatpush1.msra.mxu0 0.0
    %672 = vmatprep.subr.mxu0 0.0
    %673 = vmatpush1.msra.mxu0 0.0
    %674 = vmatprep.subr.mxu0 0.0
    %675 = vmatpush1.msra.mxu0 0.0
    %676 = vmatprep.subr.mxu0 0.0
    %677 = vmatpush1.msra.mxu0 0.0
    %678 = vmatprep.subr.mxu0 0.0
    %679 = vmatpush1.msra.mxu0 0.0
    %680 = vmatprep.subr.mxu0 0.0
    %681 = vmatpush1.msra.mxu0 0.0
    %682 = vmatprep.subr.mxu0 0.0
    %683 = vmatpush1.msra.mxu0 0.0
    %684 = vmatprep.subr.mxu0 0.0
    %685 = vmatpush1.msra.mxu0 0.0
    %686 = vmatprep.subr.mxu0 0.0
    %687 = vmatpush1.msra.mxu0 0.0
    %688 = vmatprep.subr.mxu0 0.0
    %689 = vmatpush1.msra.mxu0 0.0
    %690 = vmatprep.subr.mxu0 0.0
    %691 = vmatpush1.msra.mxu0 0.0
    %692 = vmatprep.subr.mxu0 0.0
    %693 = vmatpush1.msra.mxu0 0.0
    %694 = vmatprep.mubr.f32.mxu0 0.0
    %695 = vmatmul.mubr.f32.gmra.mrb[0].mxu0 %v628
    %v696 = vpop.f32.mrb[0].mxu0
    %v697 = vadd.f32 0.0, %v696
    %v698 = vpop.f32.mrb[0].mxu0
    %699 = vdwg.mxu0
    %v700 = vld [vmem:[#allocation5] sm:$0x1]
    %v702 = vlaneseq
    %v703 = vshrl.u32 %v702, 7
    %v704 = vsub.s32 0, %v703
    %v705 = vrot.slane %v700, %v704
    %v707 = vadd.f32 %v624, %v705
    %v708 = vmul.f32 %v697, 2.0
    %v709 = vsub.f32 %v707, %v708
    %vm710 = vcmask 523264
    %v711 = vsel %vm710, %v709, inf
    %712 = vmin.xlane.f32.xlu0 %v711
    %v713 = vpop.xlane.xlu0 %712
    %v714 = vlaneseq
    %v715 = vand.u32 %v714, 127
    %vm716 = vcmp.le.f32.partialorder %v709, %v713
    %v717 = vsel %vm716, %v715, 64
    %v718 = vsel %vm710, %v717, 2147483647
    %v719 = vand.u32 %v718, 65535
    %v720 = vshra.s32 %v718, 16
    %v721 = vcvt.s32.f32 %v719
    %v722 = vcvt.s32.f32 %v720
    %723 = vmin.xlane.f32.xlu0 %v722
    %v724 = vpop.xlane.xlu0 %723
    %vm725 = vcmp.eq.f32.partialorder %v722, %v724
    %v726 = vsel %vm725, %v721, inf
    %727 = vmin.xlane.f32.xlu0 %v726
    %v728 = vpop.xlane.xlu0 %727
    %v729 = vcvt.f32.s32 %v728
    %v730 = vcvt.f32.s32 %v724
    %v731 = vshll.u32 %v730, 16
    %v732 = vadd.s32 %v731, %v729
    %vm733 = vcmp.eq.s32.totalorder %v715, %v732
    %v734 = vsel %vm733, 1, 0
    %v735 = vcvt.s32.f32 %v734
    %v736 = vld [vmem:[%s6] sm:$0xff]
    %v737 = vld [vmem:[%s6 + $0x8] sm:$0xff]
    %v738 = vld [vmem:[%s6 + $0x10] sm:$0xff]
    %v739 = vld [vmem:[%s6 + $0x18] sm:$0xff]
    %v740 = vld [vmem:[%s6 + $0x20] sm:$0xff]
    %v741 = vld [vmem:[%s6 + $0x28] sm:$0xff]
    %v742 = vld [vmem:[%s6 + $0x30] sm:$0xff]
    %v743 = vld [vmem:[%s6 + $0x38] sm:$0xff]
    %v745 = vsel %vm710, %v735, 0
    %747 = vmatprep.subr.mxu0 0.0
    %748 = vmatpush1.msra.mxu0 %v736
    %749 = vmatprep.subr.mxu0 0.0
    %750 = vmatpush1.msra.mxu0 %v737
    %751 = vmatprep.subr.mxu0 0.0
    %752 = vmatpush1.msra.mxu0 %v738
    %753 = vmatprep.subr.mxu0 0.0
    %754 = vmatpush1.msra.mxu0 %v739
    %755 = vmatprep.subr.mxu0 0.0
    %756 = vmatpush1.msra.mxu0 %v740
    %757 = vmatprep.subr.mxu0 0.0
    %758 = vmatpush1.msra.mxu0 %v741
    %759 = vmatprep.subr.mxu0 0.0
    %760 = vmatpush1.msra.mxu0 %v742
    %761 = vmatprep.subr.mxu0 0.0
    %762 = vmatpush1.msra.mxu0 %v743
    %763 = vmatprep.subr.mxu0 0.0
    %764 = vmatpush1.msra.mxu0 0.0
    %765 = vmatprep.subr.mxu0 0.0
    %766 = vmatpush1.msra.mxu0 0.0
    %767 = vmatprep.subr.mxu0 0.0
    %768 = vmatpush1.msra.mxu0 0.0
    %769 = vmatprep.subr.mxu0 0.0
    %770 = vmatpush1.msra.mxu0 0.0
    %771 = vmatprep.subr.mxu0 0.0
    %772 = vmatpush1.msra.mxu0 0.0
    %773 = vmatprep.subr.mxu0 0.0
    %774 = vmatpush1.msra.mxu0 0.0
    %775 = vmatprep.subr.mxu0 0.0
    %776 = vmatpush1.msra.mxu0 0.0
    %777 = vmatprep.subr.mxu0 0.0
    %778 = vmatpush1.msra.mxu0 0.0
    %779 = vmatprep.subr.mxu0 0.0
    %780 = vmatpush1.msra.mxu0 0.0
    %781 = vmatprep.subr.mxu0 0.0
    %782 = vmatpush1.msra.mxu0 0.0
    %783 = vmatprep.subr.mxu0 0.0
    %784 = vmatpush1.msra.mxu0 0.0
    %785 = vmatprep.subr.mxu0 0.0
    %786 = vmatpush1.msra.mxu0 0.0
    %787 = vmatprep.subr.mxu0 0.0
    %788 = vmatpush1.msra.mxu0 0.0
    %789 = vmatprep.subr.mxu0 0.0
    %790 = vmatpush1.msra.mxu0 0.0
    %791 = vmatprep.subr.mxu0 0.0
    %792 = vmatpush1.msra.mxu0 0.0
    %793 = vmatprep.subr.mxu0 0.0
    %794 = vmatpush1.msra.mxu0 0.0
    %795 = vmatprep.subr.mxu0 0.0
    %796 = vmatpush1.msra.mxu0 0.0
    %797 = vmatprep.subr.mxu0 0.0
    %798 = vmatpush1.msra.mxu0 0.0
    %799 = vmatprep.subr.mxu0 0.0
    %800 = vmatpush1.msra.mxu0 0.0
    %801 = vmatprep.subr.mxu0 0.0
    %802 = vmatpush1.msra.mxu0 0.0
    %803 = vmatprep.subr.mxu0 0.0
    %804 = vmatpush1.msra.mxu0 0.0
    %805 = vmatprep.subr.mxu0 0.0
    %806 = vmatpush1.msra.mxu0 0.0
    %807 = vmatprep.subr.mxu0 0.0
    %808 = vmatpush1.msra.mxu0 0.0
    %809 = vmatprep.subr.mxu0 0.0
    %810 = vmatpush1.msra.mxu0 0.0
    %811 = vmatprep.mubr.f32.mxu0 0.0
    %812 = vmatmul.mubr.f32.gmra.mrb[0].mxu0 %v745
    %v813 = vpop.f32.mrb[0].mxu0
    %v814 = vadd.f32 0.0, %v813
    %v815 = vpop.f32.mrb[0].mxu0
    %816 = vdwg.mxu0
    %v817 = vlaneseq
    %v818 = vshrl.u32 %v817, 7
    %s819 = smul.u32 0, 8
    %v820 = vstv %s819
    %v821 = vadd.s32 %v818, %v820
    %vm822 = vcmp.lt.s32.totalorder %v821, 8
    %v823 = vsub.f32 %v814, %v615
    %v824 = vsel %vm822, 1, 0
    %vm825 = vcmp.eq.s32.totalorder %v824, 1
    %v826 = vsel %vm825, %v823, 0.0
    %v827 = vmul.f32 %v826, %v826
    %v828 = vsel %vm621, %v827, 0.0
    %829 = vadd.xlane.f32.xlu0 %v828
    %v830 = vpop.xlane.xlu0 %829
    %v831 = vrot.slane %v830, 4
    %v832 = vadd.f32 %v830, %v831
    %v833 = vrot.slane %v832, 2
    %v834 = vadd.f32 %v832, %v833
    %v835 = vrot.slane %v834, 1
    %v836 = vadd.f32 %v834, %v835
    %s837 = vtos %v836
    %vm838 = vcmp.eq.s32.totalorder %v818, 0
    %vm839 = vcmp.eq.s32.totalorder %v715, 0
    %vm840 = vmand %vm838, %vm839
    %v841 = vstv %s837
    %v842 = vsel %vm840, %v841, 0.0
    %843 = vst [vmem:[%s15] sm:$0xff] %v842
    %v844 = vpack.c.bf16 %v814, %v814
    %v845 = vld [vmem:[%s9] sm:$0xff]
    %v846 = vld [vmem:[%s9 + $0x8] sm:$0xff]
    %v847 = vld [vmem:[%s9 + $0x10] sm:$0xff]
    %v848 = vld [vmem:[%s9 + $0x18] sm:$0xff]
    %v849 = vld [vmem:[%s1] sm:$0xff]
    %v850 = vpack.c.bf16 %v849, %v849
    %v851 = vld [vmem:[#allocation7] sm:$0xff]
    %v852 = vld [vmem:[#allocation7 + $0x8] sm:$0xff]
    %v855 = vunpack.c.l.b16 %v851
    %v856 = vunpack.c.h.b16 %v851
    %v857 = vunpack.c.l.b16 %v852
    %v858 = vunpack.c.h.b16 %v852
    %v859 = vpack.c.b16 %v855, %v855
    %v860 = vpack.c.b16 %v856, %v856
    %v861 = vpack.c.b16 %v857, %v857
    %v862 = vpack.c.b16 %v858, %v858
    %vm863 = vcmask 64512
    %v865 = vsel %vm863, %v850, 0
    %vm867 = vcmask 1043456
    %v869 = vsel %vm867, %v859, 0
    %v872 = vsel %vm867, %v860, 0
    %v875 = vsel %vm867, %v861, 0
    %v878 = vsel %vm867, %v862, 0
    %880 = vmatprep.subr.bf16.mxu0 %v872
    %881 = vmatpush1.bf16.msra.mxu0 %v869
    %882 = vmatprep.subr.bf16.mxu0 0
    %883 = vmatpush1.bf16.msra.mxu0 0
    %884 = vmatprep.subr.bf16.mxu0 0
    %885 = vmatpush1.bf16.msra.mxu0 0
    %886 = vmatprep.subr.bf16.mxu0 0
    %887 = vmatpush1.bf16.msra.mxu0 0
    %888 = vmatprep.subr.bf16.mxu0 0
    %889 = vmatpush1.bf16.msra.mxu0 0
    %890 = vmatprep.subr.bf16.mxu0 0
    %891 = vmatpush1.bf16.msra.mxu0 0
    %892 = vmatprep.subr.bf16.mxu0 0
    %893 = vmatpush1.bf16.msra.mxu0 0
    %894 = vmatprep.subr.bf16.mxu0 0
    %895 = vmatpush1.bf16.msra.mxu0 0
    %896 = vmatprep.subr.bf16.mxu0 0
    %897 = vmatpush1.bf16.msra.mxu0 0
    %898 = vmatprep.subr.bf16.mxu0 0
    %899 = vmatpush1.bf16.msra.mxu0 0
    %900 = vmatprep.subr.bf16.mxu0 0
    %901 = vmatpush1.bf16.msra.mxu0 0
    %902 = vmatprep.subr.bf16.mxu0 0
    %903 = vmatpush1.bf16.msra.mxu0 0
    %904 = vmatprep.subr.bf16.mxu0 0
    %905 = vmatpush1.bf16.msra.mxu0 0
    %906 = vmatprep.subr.bf16.mxu0 0
    %907 = vmatpush1.bf16.msra.mxu0 0
    %908 = vmatprep.subr.bf16.mxu0 0
    %909 = vmatpush1.bf16.msra.mxu0 0
    %910 = vmatprep.subr.bf16.mxu0 0
    %911 = vmatpush1.bf16.msra.mxu0 0
    %912 = vmatprep.mubr.bf16.mxu0 0
    %913 = vmatmul.mubr.bf16.gmra.mrb[0].mxu0 %v865
    %v914 = vpop.f32.mrb[0].mxu0
    %v915 = vadd.f32 0.0, %v914
    %v916 = vpop.f32.mrb[0].mxu0
    %v917 = vadd.f32 0.0, %v916
    %v918 = vpop.f32.mrb[0].mxu0
    %v919 = vpop.f32.mrb[0].mxu0
    %920 = vdwg.mxu0
    %921 = vmatprep.subr.bf16.mxu0 %v878
    %922 = vmatpush1.bf16.msra.mxu0 %v875
    %923 = vmatprep.subr.bf16.mxu0 0
    %924 = vmatpush1.bf16.msra.mxu0 0
    %925 = vmatprep.subr.bf16.mxu0 0
    %926 = vmatpush1.bf16.msra.mxu0 0
    %927 = vmatprep.subr.bf16.mxu0 0
    %928 = vmatpush1.bf16.msra.mxu0 0
    %929 = vmatprep.subr.bf16.mxu0 0
    %930 = vmatpush1.bf16.msra.mxu0 0
    %931 = vmatprep.subr.bf16.mxu0 0
    %932 = vmatpush1.bf16.msra.mxu0 0
    %933 = vmatprep.subr.bf16.mxu0 0
    %934 = vmatpush1.bf16.msra.mxu0 0
    %935 = vmatprep.subr.bf16.mxu0 0
    %936 = vmatpush1.bf16.msra.mxu0 0
    %937 = vmatprep.subr.bf16.mxu0 0
    %938 = vmatpush1.bf16.msra.mxu0 0
    %939 = vmatprep.subr.bf16.mxu0 0
    %940 = vmatpush1.bf16.msra.mxu0 0
    %941 = vmatprep.subr.bf16.mxu0 0
    %942 = vmatpush1.bf16.msra.mxu0 0
    %943 = vmatprep.subr.bf16.mxu0 0
    %944 = vmatpush1.bf16.msra.mxu0 0
    %945 = vmatprep.subr.bf16.mxu0 0
    %946 = vmatpush1.bf16.msra.mxu0 0
    %947 = vmatprep.subr.bf16.mxu0 0
    %948 = vmatpush1.bf16.msra.mxu0 0
    %949 = vmatprep.subr.bf16.mxu0 0
    %950 = vmatpush1.bf16.msra.mxu0 0
    %951 = vmatprep.subr.bf16.mxu0 0
    %952 = vmatpush1.bf16.msra.mxu0 0
    %953 = vmatprep.mubr.bf16.mxu0 0
    %954 = vmatmul.mubr.bf16.gmra.mrb[0].mxu0 %v865
    %v955 = vpop.f32.mrb[0].mxu0
    %v956 = vadd.f32 0.0, %v955
    %v957 = vpop.f32.mrb[0].mxu0
    %v958 = vadd.f32 0.0, %v957
    %v959 = vpop.f32.mrb[0].mxu0
    %v960 = vpop.f32.mrb[0].mxu0
    %961 = vdwg.mxu0
    %v966 = vunpack.c.l.b16 %v845
    %v967 = vunpack.c.h.b16 %v845
    %v968 = vunpack.c.l.b16 %v846
    %v969 = vunpack.c.h.b16 %v846
    %v970 = vunpack.c.l.b16 %v847
    %v971 = vunpack.c.h.b16 %v847
    %v972 = vunpack.c.l.b16 %v848
    %v973 = vunpack.c.h.b16 %v848
    %v974 = vpack.c.b16 %v970, %v966
    %v975 = vpack.c.b16 %v971, %v967
    %v976 = vpack.c.b16 %v972, %v968
    %v977 = vpack.c.b16 %v973, %v969
    %v983 = vsel %vm621, %v844, 0
    %985 = vmatprep.subr.bf16.mxu0 %v975
    %986 = vmatpush1.bf16.msra.mxu0 %v974
    %987 = vmatprep.subr.bf16.mxu0 0
    %988 = vmatpush1.bf16.msra.mxu0 0
    %989 = vmatprep.subr.bf16.mxu0 0
    %990 = vmatpush1.bf16.msra.mxu0 0
    %991 = vmatprep.subr.bf16.mxu0 0
    %992 = vmatpush1.bf16.msra.mxu0 0
    %993 = vmatprep.subr.bf16.mxu0 0
    %994 = vmatpush1.bf16.msra.mxu0 0
    %995 = vmatprep.subr.bf16.mxu0 0
    %996 = vmatpush1.bf16.msra.mxu0 0
    %997 = vmatprep.subr.bf16.mxu0 0
    %998 = vmatpush1.bf16.msra.mxu0 0
    %999 = vmatprep.subr.bf16.mxu0 0
    %1000 = vmatpush1.bf16.msra.mxu0 0
    %1001 = vmatprep.subr.bf16.mxu0 0
    %1002 = vmatpush1.bf16.msra.mxu0 0
    %1003 = vmatprep.subr.bf16.mxu0 0
    %1004 = vmatpush1.bf16.msra.mxu0 0
    %1005 = vmatprep.subr.bf16.mxu0 0
    %1006 = vmatpush1.bf16.msra.mxu0 0
    %1007 = vmatprep.subr.bf16.mxu0 0
    %1008 = vmatpush1.bf16.msra.mxu0 0
    %1009 = vmatprep.subr.bf16.mxu0 0
    %1010 = vmatpush1.bf16.msra.mxu0 0
    %1011 = vmatprep.subr.bf16.mxu0 0
    %1012 = vmatpush1.bf16.msra.mxu0 0
    %1013 = vmatprep.subr.bf16.mxu0 0
    %1014 = vmatpush1.bf16.msra.mxu0 0
    %1015 = vmatprep.subr.bf16.mxu0 0
    %1016 = vmatpush1.bf16.msra.mxu0 0
    %1017 = vmatprep.mubr.bf16.mxu0 0
    %1018 = vmatmul.mubr.bf16.gmra.mrb[0].mxu0 %v983
    %v1019 = vpop.f32.mrb[0].mxu0
    %v1020 = vadd.f32 %v915, %v1019
    %v1021 = vpop.f32.mrb[0].mxu0
    %v1022 = vadd.f32 %v917, %v1021
    %v1023 = vpop.f32.mrb[0].mxu0
    %v1024 = vpop.f32.mrb[0].mxu0
    %1025 = vdwg.mxu0
    %1026 = vmatprep.subr.bf16.mxu0 %v977
    %1027 = vmatpush1.bf16.msra.mxu0 %v976
    %1028 = vmatprep.subr.bf16.mxu0 0
    %1029 = vmatpush1.bf16.msra.mxu0 0
    %1030 = vmatprep.subr.bf16.mxu0 0
    %1031 = vmatpush1.bf16.msra.mxu0 0
    %1032 = vmatprep.subr.bf16.mxu0 0
    %1033 = vmatpush1.bf16.msra.mxu0 0
    %1034 = vmatprep.subr.bf16.mxu0 0
    %1035 = vmatpush1.bf16.msra.mxu0 0
    %1036 = vmatprep.subr.bf16.mxu0 0
    %1037 = vmatpush1.bf16.msra.mxu0 0
    %1038 = vmatprep.subr.bf16.mxu0 0
    %1039 = vmatpush1.bf16.msra.mxu0 0
    %1040 = vmatprep.subr.bf16.mxu0 0
    %1041 = vmatpush1.bf16.msra.mxu0 0
    %1042 = vmatprep.subr.bf16.mxu0 0
    %1043 = vmatpush1.bf16.msra.mxu0 0
    %1044 = vmatprep.subr.bf16.mxu0 0
    %1045 = vmatpush1.bf16.msra.mxu0 0
    %1046 = vmatprep.subr.bf16.mxu0 0
    %1047 = vmatpush1.bf16.msra.mxu0 0
    %1048 = vmatprep.subr.bf16.mxu0 0
    %1049 = vmatpush1.bf16.msra.mxu0 0
    %1050 = vmatprep.subr.bf16.mxu0 0
    %1051 = vmatpush1.bf16.msra.mxu0 0
    %1052 = vmatprep.subr.bf16.mxu0 0
    %1053 = vmatpush1.bf16.msra.mxu0 0
    %1054 = vmatprep.subr.bf16.mxu0 0
    %1055 = vmatpush1.bf16.msra.mxu0 0
    %1056 = vmatprep.subr.bf16.mxu0 0
    %1057 = vmatpush1.bf16.msra.mxu0 0
    %1058 = vmatprep.mubr.bf16.mxu0 0
    %1059 = vmatmul.mubr.bf16.gmra.mrb[0].mxu0 %v983
    %v1060 = vpop.f32.mrb[0].mxu0
    %v1061 = vadd.f32 %v956, %v1060
    %v1062 = vpop.f32.mrb[0].mxu0
    %v1063 = vadd.f32 %v958, %v1062
    %v1064 = vpop.f32.mrb[0].mxu0
    %v1065 = vpop.f32.mrb[0].mxu0
    %1066 = vdwg.mxu0
    %v1067 = vld [vmem:[#allocation8] sm:$0xf]
    %v1069 = vlaneseq
    %v1070 = vshrl.u32 %v1069, 7
    %v1071 = vsub.s32 0, %v1070
    %v1072 = vrot.slane %v1067, %v1071
    %v1073 = vlaneseq
    %v1074 = vshrl.u32 %v1073, 7
    %v1075 = vsub.s32 1, %v1074
    %v1076 = vrot.slane %v1067, %v1075
    %v1077 = vlaneseq
    %v1078 = vshrl.u32 %v1077, 7
    %v1079 = vsub.s32 2, %v1078
    %v1080 = vrot.slane %v1067, %v1079
    %v1081 = vlaneseq
    %v1082 = vshrl.u32 %v1081, 7
    %v1083 = vsub.s32 3, %v1082
    %v1084 = vrot.slane %v1067, %v1083
    %v1089 = vadd.f32 %v1020, %v1072
    %v1090 = vadd.f32 %v1022, %v1076
    %v1091 = vadd.f32 %v1061, %v1080
    %v1092 = vadd.f32 %v1063, %v1084
    %v1093 = vmax.f32 %v1089, 0.0
    %v1094 = vmax.f32 %v1090, 0.0
    %v1095 = vmax.f32 %v1091, 0.0
    %v1096 = vmax.f32 %v1092, 0.0
    %v1097 = vpack.c.bf16 %v1093, %v1093
    %v1098 = vpack.c.bf16 %v1094, %v1094
    %v1099 = vpack.c.bf16 %v1095, %v1095
    %v1100 = vpack.c.bf16 %v1096, %v1096
    %v1101 = vld [vmem:[%s12] sm:$0xf]
    %v1102 = vld [vmem:[%s12 + $0x4] sm:$0xf]
    %v1103 = vld [vmem:[%s12 + $0x8] sm:$0xf]
    %v1104 = vld [vmem:[%s12 + $0xc] sm:$0xf]
    %v1105 = vld [vmem:[%s12 + $0x10] sm:$0xf]
    %v1106 = vld [vmem:[%s12 + $0x14] sm:$0xf]
    %v1107 = vld [vmem:[%s12 + $0x18] sm:$0xf]
    %v1108 = vld [vmem:[%s12 + $0x1c] sm:$0xf]
    %v1109 = vld [vmem:[%s12 + $0x20] sm:$0xf]
    %v1110 = vld [vmem:[%s12 + $0x24] sm:$0xf]
    %v1111 = vld [vmem:[%s12 + $0x28] sm:$0xf]
    %v1112 = vld [vmem:[%s12 + $0x2c] sm:$0xf]
    %v1113 = vld [vmem:[%s12 + $0x30] sm:$0xf]
    %v1114 = vld [vmem:[%s12 + $0x34] sm:$0xf]
    %v1115 = vld [vmem:[%s12 + $0x38] sm:$0xf]
    %v1116 = vld [vmem:[%s12 + $0x3c] sm:$0xf]
    %v1117 = vld [vmem:[%s12 + $0x40] sm:$0xf]
    %v1118 = vld [vmem:[%s12 + $0x44] sm:$0xf]
    %v1119 = vld [vmem:[%s12 + $0x48] sm:$0xf]
    %v1120 = vld [vmem:[%s12 + $0x4c] sm:$0xf]
    %v1121 = vld [vmem:[%s12 + $0x50] sm:$0xf]
    %v1122 = vld [vmem:[%s12 + $0x54] sm:$0xf]
    %v1123 = vld [vmem:[%s12 + $0x58] sm:$0xf]
    %v1124 = vld [vmem:[%s12 + $0x5c] sm:$0xf]
    %v1125 = vld [vmem:[%s12 + $0x60] sm:$0xf]
    %v1126 = vld [vmem:[%s12 + $0x64] sm:$0xf]
    %v1127 = vld [vmem:[%s12 + $0x68] sm:$0xf]
    %v1128 = vld [vmem:[%s12 + $0x6c] sm:$0xf]
    %v1129 = vld [vmem:[%s12 + $0x70] sm:$0xf]
    %v1130 = vld [vmem:[%s12 + $0x74] sm:$0xf]
    %v1131 = vld [vmem:[%s12 + $0x78] sm:$0xf]
    %v1132 = vld [vmem:[%s12 + $0x7c] sm:$0xf]
    %v1133 = vld [vmem:[%s12 + $0x80] sm:$0xf]
    %v1134 = vld [vmem:[%s12 + $0x84] sm:$0xf]
    %v1135 = vld [vmem:[%s12 + $0x88] sm:$0xf]
    %v1136 = vld [vmem:[%s12 + $0x8c] sm:$0xf]
    %v1137 = vld [vmem:[%s12 + $0x90] sm:$0xf]
    %v1138 = vld [vmem:[%s12 + $0x94] sm:$0xf]
    %v1139 = vld [vmem:[%s12 + $0x98] sm:$0xf]
    %v1140 = vld [vmem:[%s12 + $0x9c] sm:$0xf]
    %v1141 = vld [vmem:[%s12 + $0xa0] sm:$0xf]
    %v1142 = vld [vmem:[%s12 + $0xa4] sm:$0xf]
    %v1143 = vld [vmem:[%s12 + $0xa8] sm:$0xf]
    %v1144 = vld [vmem:[%s12 + $0xac] sm:$0xf]
    %v1145 = vld [vmem:[%s12 + $0xb0] sm:$0xf]
    %v1146 = vld [vmem:[%s12 + $0xb4] sm:$0xf]
    %v1147 = vld [vmem:[%s12 + $0xb8] sm:$0xf]
    %v1148 = vld [vmem:[%s12 + $0xbc] sm:$0xf]
    %v1149 = vld [vmem:[%s12 + $0xc0] sm:$0xf]
    %v1150 = vld [vmem:[%s12 + $0xc4] sm:$0xf]
    %v1151 = vld [vmem:[%s12 + $0xc8] sm:$0xf]
    %v1152 = vld [vmem:[%s12 + $0xcc] sm:$0xf]
    %v1153 = vld [vmem:[%s12 + $0xd0] sm:$0xf]
    %v1154 = vld [vmem:[%s12 + $0xd4] sm:$0xf]
    %v1155 = vld [vmem:[%s12 + $0xd8] sm:$0xf]
    %v1156 = vld [vmem:[%s12 + $0xdc] sm:$0xf]
    %v1157 = vld [vmem:[%s12 + $0xe0] sm:$0xf]
    %v1158 = vld [vmem:[%s12 + $0xe4] sm:$0xf]
    %v1159 = vld [vmem:[%s12 + $0xe8] sm:$0xf]
    %v1160 = vld [vmem:[%s12 + $0xec] sm:$0xf]
    %v1161 = vld [vmem:[%s12 + $0xf0] sm:$0xf]
    %v1162 = vld [vmem:[%s12 + $0xf4] sm:$0xf]
    %v1163 = vld [vmem:[%s12 + $0xf8] sm:$0xf]
    %v1164 = vld [vmem:[%s12 + $0xfc] sm:$0xf]
    %v1165 = vld [vmem:[#allocation10] sm:$0x1]
    %v1167 = vlaneseq
    %v1168 = vshrl.u32 %v1167, 7
    %v1169 = vsub.s32 0, %v1168
    %v1170 = vrot.slane %v1165, %v1169
    %v1236 = vunpack.c.l.b16 %v1101
    %v1237 = vunpack.c.l.b16 %v1102
    %v1238 = vunpack.c.l.b16 %v1103
    %v1239 = vunpack.c.l.b16 %v1104
    %v1240 = vunpack.c.l.b16 %v1105
    %v1241 = vunpack.c.l.b16 %v1106
    %v1242 = vunpack.c.l.b16 %v1107
    %v1243 = vunpack.c.l.b16 %v1108
    %v1244 = vunpack.c.l.b16 %v1109
    %v1245 = vunpack.c.l.b16 %v1110
    %v1246 = vunpack.c.l.b16 %v1111
    %v1247 = vunpack.c.l.b16 %v1112
    %v1248 = vunpack.c.l.b16 %v1113
    %v1249 = vunpack.c.l.b16 %v1114
    %v1250 = vunpack.c.l.b16 %v1115
    %v1251 = vunpack.c.l.b16 %v1116
    %v1252 = vunpack.c.l.b16 %v1117
    %v1253 = vunpack.c.l.b16 %v1118
    %v1254 = vunpack.c.l.b16 %v1119
    %v1255 = vunpack.c.l.b16 %v1120
    %v1256 = vunpack.c.l.b16 %v1121
    %v1257 = vunpack.c.l.b16 %v1122
    %v1258 = vunpack.c.l.b16 %v1123
    %v1259 = vunpack.c.l.b16 %v1124
    %v1260 = vunpack.c.l.b16 %v1125
    %v1261 = vunpack.c.l.b16 %v1126
    %v1262 = vunpack.c.l.b16 %v1127
    %v1263 = vunpack.c.l.b16 %v1128
    %v1264 = vunpack.c.l.b16 %v1129
    %v1265 = vunpack.c.l.b16 %v1130
    %v1266 = vunpack.c.l.b16 %v1131
    %v1267 = vunpack.c.l.b16 %v1132
    %v1268 = vunpack.c.l.b16 %v1133
    %v1269 = vunpack.c.l.b16 %v1134
    %v1270 = vunpack.c.l.b16 %v1135
    %v1271 = vunpack.c.l.b16 %v1136
    %v1272 = vunpack.c.l.b16 %v1137
    %v1273 = vunpack.c.l.b16 %v1138
    %v1274 = vunpack.c.l.b16 %v1139
    %v1275 = vunpack.c.l.b16 %v1140
    %v1276 = vunpack.c.l.b16 %v1141
    %v1277 = vunpack.c.l.b16 %v1142
    %v1278 = vunpack.c.l.b16 %v1143
    %v1279 = vunpack.c.l.b16 %v1144
    %v1280 = vunpack.c.l.b16 %v1145
    %v1281 = vunpack.c.l.b16 %v1146
    %v1282 = vunpack.c.l.b16 %v1147
    %v1283 = vunpack.c.l.b16 %v1148
    %v1284 = vunpack.c.l.b16 %v1149
    %v1285 = vunpack.c.l.b16 %v1150
    %v1286 = vunpack.c.l.b16 %v1151
    %v1287 = vunpack.c.l.b16 %v1152
    %v1288 = vunpack.c.l.b16 %v1153
    %v1289 = vunpack.c.l.b16 %v1154
    %v1290 = vunpack.c.l.b16 %v1155
    %v1291 = vunpack.c.l.b16 %v1156
    %v1292 = vunpack.c.l.b16 %v1157
    %v1293 = vunpack.c.l.b16 %v1158
    %v1294 = vunpack.c.l.b16 %v1159
    %v1295 = vunpack.c.l.b16 %v1160
    %v1296 = vunpack.c.l.b16 %v1161
    %v1297 = vunpack.c.l.b16 %v1162
    %v1298 = vunpack.c.l.b16 %v1163
    %v1299 = vunpack.c.l.b16 %v1164
    %v1300 = vpack.c.b16 %v1237, %v1236
    %v1301 = vpack.c.b16 %v1239, %v1238
    %v1302 = vpack.c.b16 %v1241, %v1240
    %v1303 = vpack.c.b16 %v1243, %v1242
    %v1304 = vpack.c.b16 %v1245, %v1244
    %v1305 = vpack.c.b16 %v1247, %v1246
    %v1306 = vpack.c.b16 %v1249, %v1248
    %v1307 = vpack.c.b16 %v1251, %v1250
    %v1308 = vpack.c.b16 %v1253, %v1252
    %v1309 = vpack.c.b16 %v1255, %v1254
    %v1310 = vpack.c.b16 %v1257, %v1256
    %v1311 = vpack.c.b16 %v1259, %v1258
    %v1312 = vpack.c.b16 %v1261, %v1260
    %v1313 = vpack.c.b16 %v1263, %v1262
    %v1314 = vpack.c.b16 %v1265, %v1264
    %v1315 = vpack.c.b16 %v1267, %v1266
    %v1316 = vpack.c.b16 %v1269, %v1268
    %v1317 = vpack.c.b16 %v1271, %v1270
    %v1318 = vpack.c.b16 %v1273, %v1272
    %v1319 = vpack.c.b16 %v1275, %v1274
    %v1320 = vpack.c.b16 %v1277, %v1276
    %v1321 = vpack.c.b16 %v1279, %v1278
    %v1322 = vpack.c.b16 %v1281, %v1280
    %v1323 = vpack.c.b16 %v1283, %v1282
    %v1324 = vpack.c.b16 %v1285, %v1284
    %v1325 = vpack.c.b16 %v1287, %v1286
    %v1326 = vpack.c.b16 %v1289, %v1288
    %v1327 = vpack.c.b16 %v1291, %v1290
    %v1328 = vpack.c.b16 %v1293, %v1292
    %v1329 = vpack.c.b16 %v1295, %v1294
    %v1330 = vpack.c.b16 %v1297, %v1296
    %v1331 = vpack.c.b16 %v1299, %v1298
    %1364 = vmatprep.subr.bf16.mxu0 0
    %1365 = vmatpush1.bf16.msra.mxu0 %v1300
    %1366 = vmatprep.subr.bf16.mxu0 0
    %1367 = vmatpush1.bf16.msra.mxu0 %v1301
    %1368 = vmatprep.subr.bf16.mxu0 0
    %1369 = vmatpush1.bf16.msra.mxu0 %v1302
    %1370 = vmatprep.subr.bf16.mxu0 0
    %1371 = vmatpush1.bf16.msra.mxu0 %v1303
    %1372 = vmatprep.subr.bf16.mxu0 0
    %1373 = vmatpush1.bf16.msra.mxu0 %v1304
    %1374 = vmatprep.subr.bf16.mxu0 0
    %1375 = vmatpush1.bf16.msra.mxu0 %v1305
    %1376 = vmatprep.subr.bf16.mxu0 0
    %1377 = vmatpush1.bf16.msra.mxu0 %v1306
    %1378 = vmatprep.subr.bf16.mxu0 0
    %1379 = vmatpush1.bf16.msra.mxu0 %v1307
    %1380 = vmatprep.subr.bf16.mxu0 0
    %1381 = vmatpush1.bf16.msra.mxu0 %v1308
    %1382 = vmatprep.subr.bf16.mxu0 0
    %1383 = vmatpush1.bf16.msra.mxu0 %v1309
    %1384 = vmatprep.subr.bf16.mxu0 0
    %1385 = vmatpush1.bf16.msra.mxu0 %v1310
    %1386 = vmatprep.subr.bf16.mxu0 0
    %1387 = vmatpush1.bf16.msra.mxu0 %v1311
    %1388 = vmatprep.subr.bf16.mxu0 0
    %1389 = vmatpush1.bf16.msra.mxu0 %v1312
    %1390 = vmatprep.subr.bf16.mxu0 0
    %1391 = vmatpush1.bf16.msra.mxu0 %v1313
    %1392 = vmatprep.subr.bf16.mxu0 0
    %1393 = vmatpush1.bf16.msra.mxu0 %v1314
    %1394 = vmatprep.subr.bf16.mxu0 0
    %1395 = vmatpush1.bf16.msra.mxu0 %v1315
    %1396 = vmatprep.mubr.bf16.mxu0 %v1098
    %1397 = vmatmul.mubr.bf16.gmra.mrb[0].mxu0 %v1097
    %v1398 = vpop.f32.mrb[0].mxu0
    %v1399 = vadd.f32 %v1170, %v1398
    %v1400 = vpop.f32.mrb[0].mxu0
    %v1401 = vpop.f32.mrb[0].mxu0
    %v1402 = vpop.f32.mrb[0].mxu0
    %1403 = vdwg.mxu0
    %1404 = vmatprep.subr.bf16.mxu0 0
    %1405 = vmatpush1.bf16.msra.mxu0 %v1316
    %1406 = vmatprep.subr.bf16.mxu0 0
    %1407 = vmatpush1.bf16.msra.mxu0 %v1317
    %1408 = vmatprep.subr.bf16.mxu0 0
    %1409 = vmatpush1.bf16.msra.mxu0 %v1318
    %1410 = vmatprep.subr.bf16.mxu0 0
    %1411 = vmatpush1.bf16.msra.mxu0 %v1319
    %1412 = vmatprep.subr.bf16.mxu0 0
    %1413 = vmatpush1.bf16.msra.mxu0 %v1320
    %1414 = vmatprep.subr.bf16.mxu0 0
    %1415 = vmatpush1.bf16.msra.mxu0 %v1321
    %1416 = vmatprep.subr.bf16.mxu0 0
    %1417 = vmatpush1.bf16.msra.mxu0 %v1322
    %1418 = vmatprep.subr.bf16.mxu0 0
    %1419 = vmatpush1.bf16.msra.mxu0 %v1323
    %1420 = vmatprep.subr.bf16.mxu0 0
    %1421 = vmatpush1.bf16.msra.mxu0 %v1324
    %1422 = vmatprep.subr.bf16.mxu0 0
    %1423 = vmatpush1.bf16.msra.mxu0 %v1325
    %1424 = vmatprep.subr.bf16.mxu0 0
    %1425 = vmatpush1.bf16.msra.mxu0 %v1326
    %1426 = vmatprep.subr.bf16.mxu0 0
    %1427 = vmatpush1.bf16.msra.mxu0 %v1327
    %1428 = vmatprep.subr.bf16.mxu0 0
    %1429 = vmatpush1.bf16.msra.mxu0 %v1328
    %1430 = vmatprep.subr.bf16.mxu0 0
    %1431 = vmatpush1.bf16.msra.mxu0 %v1329
    %1432 = vmatprep.subr.bf16.mxu0 0
    %1433 = vmatpush1.bf16.msra.mxu0 %v1330
    %1434 = vmatprep.subr.bf16.mxu0 0
    %1435 = vmatpush1.bf16.msra.mxu0 %v1331
    %1436 = vmatprep.mubr.bf16.mxu0 %v1100
    %1437 = vmatmul.mubr.bf16.gmra.mrb[0].mxu0 %v1099
    %v1438 = vpop.f32.mrb[0].mxu0
    %v1439 = vadd.f32 %v1399, %v1438
    %v1440 = vpop.f32.mrb[0].mxu0
    %v1441 = vpop.f32.mrb[0].mxu0
    %v1442 = vpop.f32.mrb[0].mxu0
    %1443 = vdwg.mxu0
    %1444 = vst [vmem:[#allocation11] sm:$0xff] %v1439
    // Predicated region
    $region78: #{conditional_vqvae_forward.1} parent=1 // pred_check
      _
    $region79: #{conditional_vqvae_forward.1} parent=1 // pred_check_branch
      %1446 = sbr.rel (0) target = $region81
    $region80: #{conditional_vqvae_forward.1} parent=1 // pred_region
      %s1448 = ssub.s32 128, 128
      %1449 = vsyncadd [#allocation4], %s1448
      %s1451 = sshll.u32 [#allocation11], 4
      %s1452 = int_to_ptr.vmem [resolvable:$true] %s1451
      %1454 = dma.vmem_to_hbm [thread:$0]  %s1452, 128, %s14, [#allocation4]
    $region81: #{conditional_vqvae_forward.1} parent=1 // pred_fallthru
      _
    // Predicated region
    $region82: #{conditional_vqvae_forward.1} parent=1 // pred_check
      _
    $region83: #{conditional_vqvae_forward.1} parent=1 // pred_check_branch
      %1456 = sbr.rel (0) target = $region85
    $region84: #{conditional_vqvae_forward.1} parent=1 // pred_region
      _
    $region85: #{conditional_vqvae_forward.1} parent=1 // pred_fallthru
      _
    // Predicated region
    $region86: #{conditional_vqvae_forward.1} parent=1 // pred_check
      _
    $region87: #{conditional_vqvae_forward.1} parent=1 // pred_check_branch
      %1458 = sbr.rel (0) target = $region89
    $region88: #{conditional_vqvae_forward.1} parent=1 // pred_region
      %1459 = dma.done [#allocation4], 128
    $region89: #{conditional_vqvae_forward.1} parent=1 // pred_fallthru
      _
    // Predicated region
    $region90: #{conditional_vqvae_forward.1} parent=1 // pred_check
      _
    $region91: #{conditional_vqvae_forward.1} parent=1 // pred_check_branch
      %1461 = sbr.rel (0) target = $region93
    $region92: #{conditional_vqvae_forward.1} parent=1 // pred_region
      _
    $region93: #{conditional_vqvae_forward.1} parent=1 // pred_fallthru
      _
    %1462 = vsyncpa [#allocation3], 1
    %1463 = vsyncpa [#allocation6], 1
    %1464 = vsyncpa [#allocation9], 1
    %1465 = vsyncpa [#allocation4], 1

</llo_original>
